<compile_context>
chip_gen: v6e
topology: v6e:2x2x1
jax: 0.10.0
libtpu: 0.0.40
codegen_flags: <defaults>
</compile_context>

<pallas_src>
import jax
import jax.numpy as jnp
from jax import lax
from jax.experimental import pallas as pl
from jax.experimental.pallas import tpu as pltpu


def _round_up(x, m):
    return ((x + m - 1) // m) * m


# ---------------------------------------------------------------------------
# Pallas kernel
# ---------------------------------------------------------------------------
def _make_basic_conv_kernel(KH, KW, H_out, W_out, dil_h, dil_w, apply_relu):
    """Fused conv(KHxKW, stride=1) + folded-BN affine + optional ReLU."""
    M = H_out * W_out

    def kernel(x_ref, w_ref, scale_ref, bias_ref, out_ref):
        # x_ref:     (1, H_pad, W_pad, Cin_p)   bf16 (spatial+channel padded)
        # w_ref:     (KH*KW*Cin_p, Cout_p)      bf16 (taps folded into K)
        # scale_ref: (1, Cout_p)                f32  (folded BN scale)
        # bias_ref:  (1, Cout_p)                f32  (folded BN bias + conv bias)
        # out_ref:   (1, M, Cout_p)             f32
        x = x_ref[0]                                  # (H_pad, W_pad, Cin_p)
        cin_p = x.shape[-1]

        # Shifted-window slices of the VMEM tile, concatenated along channels:
        # column order = (kh, kw, cin), matching the folded weight layout.
        taps = []
        for kh in range(KH):
            h0 = kh * dil_h
            for kw in range(KW):
                w0 = kw * dil_w
                taps.append(x[h0:h0 + H_out, w0:w0 + W_out, :])
        patches = jnp.concatenate(taps, axis=-1)      # (H_out, W_out, KH*KW*Cin_p)
        patches = patches.reshape(M, KH * KW * cin_p)

        # Single MXU matmul: bf16 operands, f32 accumulation.
        acc = jnp.dot(patches, w_ref[...], preferred_element_type=jnp.float32)

        # Epilogue in f32: folded BN affine (+ folded conv bias) and ReLU.
        y = acc * scale_ref[...] + bias_ref[...]
        if apply_relu:
            y = jnp.maximum(y, 0.0)
        out_ref[0] = y

    return kernel


# ---------------------------------------------------------------------------
# Wrapper (layout / parameter preparation + pallas_call)
# ---------------------------------------------------------------------------
def basic_conv_forward(x_nchw, params, *, kernel_size=3, stride=1, padding=0,
                       dilation=1, groups=1, relu=True, bn=True, eps=1e-5):
    """BasicConv forward: conv -> (BN) -> (ReLU). Accepts/returns NCHW."""
    if stride != 1 or groups != 1:
        # TODO(synk): stride>1 / grouped conv not implemented in the kernel.
        raise NotImplementedError("only stride=1, groups=1 supported")

    KH = KW = int(kernel_size)
    ph = pw = int(padding)
    dh = dw = int(dilation)

    N, Cin, H, W = x_nchw.shape
    w_oihw = params["conv_w"]
    Cout, Cin_w, KH_w, KW_w = w_oihw.shape
    assert Cin_w == Cin and KH_w == KH and KW_w == KW

    H_out = H + 2 * ph - dh * (KH - 1)
    W_out = W + 2 * pw - dw * (KW - 1)
    H_pad, W_pad = H + 2 * ph, W + 2 * pw
    M = H_out * W_out

    # Pad channels to multiples of 128: lane-dense input/output, 128-aligned K.
    Cin_p = _round_up(Cin, 128)
    Cout_p = _round_up(Cout, 128)
    K_fold = KH * KW * Cin_p

    # Input: NCHW -> NHWC, spatial zero-pad, channel zero-pad, bf16 operands.
    x = jnp.transpose(x_nchw, (0, 2, 3, 1)).astype(jnp.float32)
    x = jnp.pad(x, ((0, 0), (ph, ph), (pw, pw), (0, Cin_p - Cin)))
    x = x.astype(jnp.bfloat16)

    # Weights: OIHW -> (KH, KW, Cin_p, Cout_p) -> (KH*KW*Cin_p, Cout_p), bf16.
    w = jnp.transpose(w_oihw, (2, 3, 1, 0)).astype(jnp.float32)
    w = jnp.pad(w, ((0, 0), (0, 0), (0, Cin_p - Cin), (0, Cout_p - Cout)))
    w = w.reshape(K_fold, Cout_p).astype(jnp.bfloat16)

    # Fold BN (inference running stats) and optional conv bias into scale/bias.
    if bn:
        scale = params["bn_gamma"].astype(jnp.float32) / jnp.sqrt(
            params["bn_var"].astype(jnp.float32) + eps)
        bias = params["bn_beta"].astype(jnp.float32) - \
            params["bn_mean"].astype(jnp.float32) * scale
    else:
        scale = jnp.ones((Cout,), jnp.float32)
        bias = jnp.zeros((Cout,), jnp.float32)
    conv_b = params.get("conv_b")
    if conv_b is not None:
        bias = bias + scale * conv_b.astype(jnp.float32)
    scale = jnp.pad(scale, (0, Cout_p - Cout))[None, :]   # (1, Cout_p)
    bias = jnp.pad(bias, (0, Cout_p - Cout))[None, :]     # (1, Cout_p)

    kernel = _make_basic_conv_kernel(KH, KW, H_out, W_out, dh, dw, relu)

    bytes_accessed = (int(x.size) * 2 + int(w.size) * 2 +
                      int(scale.size) * 4 + int(bias.size) * 4 +
                      N * M * Cout_p * 4)

    out = pl.pallas_call(
        kernel,
        out_shape=jax.ShapeDtypeStruct((N, M, Cout_p), jnp.float32),
        grid=(N,),
        in_specs=[
            # one padded image per grid step
            pl.BlockSpec((1, H_pad, W_pad, Cin_p), lambda n: (n, 0, 0, 0)),
            # weights / BN affine: constant block index -> DMA'd once, resident
            pl.BlockSpec((K_fold, Cout_p), lambda n: (0, 0)),
            pl.BlockSpec((1, Cout_p), lambda n: (0, 0)),
            pl.BlockSpec((1, Cout_p), lambda n: (0, 0)),
        ],
        out_specs=pl.BlockSpec((1, M, Cout_p), lambda n: (n, 0, 0)),
        compiler_params=pltpu.CompilerParams(
            dimension_semantics=("parallel",),        # 2 TCs on v7x
            vmem_limit_bytes=32 * 1024 * 1024),
        cost_estimate=pl.CostEstimate(
            flops=2 * N * M * K_fold * Cout_p,
            transcendentals=0,
            bytes_accessed=bytes_accessed),
    )(x, w, scale, bias)

    out = out.reshape(N, H_out, W_out, Cout_p)[..., :Cout]
    return jnp.transpose(out, (0, 3, 1, 2))            # NHWC -> NCHW


# ---------------------------------------------------------------------------
# Pure-JAX reference (for correctness check; matches bf16 matmul operands)
# ---------------------------------------------------------------------------
def reference_forward(x, params, *, stride=1, padding=0, dilation=1,
                      relu=True, bn=True, eps=1e-5):
    xb = x.astype(jnp.bfloat16).astype(jnp.float32)
    wb = params["conv_w"].astype(jnp.bfloat16).astype(jnp.float32)
    y = lax.conv_general_dilated(
        xb, wb, window_strides=(stride, stride),
        padding=((padding, padding), (padding, padding)),
        rhs_dilation=(dilation, dilation),
        dimension_numbers=("NCHW", "OIHW", "NCHW"))
    if params.get("conv_b") is not None:
        y = y + params["conv_b"][None, :, None, None]
    if bn:
        g = params["bn_gamma"][None, :, None, None]
        b = params["bn_beta"][None, :, None, None]
        m = params["bn_mean"][None, :, None, None]
        v = params["bn_var"][None, :, None, None]
        y = (y - m) / jnp.sqrt(v + eps) * g + b
    if relu:
        y = jax.nn.relu(y)
    return y


# ---------------------------------------------------------------------------
# Main
# ---------------------------------------------------------------------------
if __name__ == "__main__":
    N, Cin, H, W = 2, 4, 16, 16
    Cout, K = 8, 3

    key = jax.random.PRNGKey(0)
    ks = jax.random.split(key, 6)

    x = jax.random.normal(ks[0], (N, Cin, H, W), jnp.float32)
    params = {
        "conv_w": 0.2 * jax.random.normal(ks[1], (Cout, Cin, K, K), jnp.float32),
        "conv_b": None,  # bias=False (BasicConv default)
        "bn_gamma": 1.0 + 0.1 * jax.random.normal(ks[2], (Cout,), jnp.float32),
        "bn_beta": 0.1 * jax.random.normal(ks[3], (Cout,), jnp.float32),
        "bn_mean": 0.1 * jax.random.normal(ks[4], (Cout,), jnp.float32),
        "bn_var": jax.random.uniform(ks[5], (Cout,), jnp.float32, 0.5, 1.5),
    }

    out = jax.block_until_ready(
        basic_conv_forward(x, params, kernel_size=K, stride=1, padding=1))
    ref = jax.block_until_ready(
        reference_forward(x, params, stride=1, padding=1))

    assert out.shape == (N, Cout, H, W), out.shape
    max_err = jnp.max(jnp.abs(out - ref))
    assert jnp.allclose(out, ref, atol=1e-3, rtol=1e-3), \
        f"max abs err {max_err}"

    print("KERNEL_OK")
</pallas_src>

<mosaic_0001>
module attributes {stable_mosaic.version = 11 : i64} {
  func.func @kernel(%arg0: i32, %arg1: memref<1x18x18x128xbf16, #tpu.memory_space<vmem>>, %arg2: memref<1152x128xbf16, #tpu.memory_space<vmem>>, %arg3: memref<1x128xf32, #tpu.memory_space<vmem>>, %arg4: memref<1x128xf32, #tpu.memory_space<vmem>>, %arg5: memref<1x256x128xf32, #tpu.memory_space<vmem>>) attributes {dimension_semantics = [#tpu.dimension_semantics<parallel>], iteration_bounds = array<i64: 2>, scalar_prefetch = 0 : i64, scratch_operands = 0 : i64, tpu.core_type = #tpu.core_type<tc>, window_params = [{transform_indices = @transform_0, window_bounds = array<i64: 1, 18, 18, 128>}, {pipeline_mode = #tpu.pipeline_mode<synchronous>, transform_indices = @transform_1, window_bounds = array<i64: 1152, 128>}, {pipeline_mode = #tpu.pipeline_mode<synchronous>, transform_indices = @transform_2, window_bounds = array<i64: 1, 128>}, {pipeline_mode = #tpu.pipeline_mode<synchronous>, transform_indices = @transform_3, window_bounds = array<i64: 1, 128>}, {transform_indices = @transform_4, window_bounds = array<i64: 1, 256, 128>}]} {
    %c0 = arith.constant 0 : index
    %c0_0 = arith.constant 0 : index
    %c0_1 = arith.constant 0 : index
    %c0_2 = arith.constant 0 : index
    %0 = vector.load %arg1[%c0, %c0_0, %c0_1, %c0_2] : memref<1x18x18x128xbf16, #tpu.memory_space<vmem>>, vector<1x18x18x128xbf16>
    %1 = vector.shape_cast %0 : vector<1x18x18x128xbf16> to vector<18x18x128xbf16>
    %2 = vector.extract_strided_slice %1 {offsets = [0, 0, 0], sizes = [16, 16, 128], strides = [1, 1, 1]} : vector<18x18x128xbf16> to vector<16x16x128xbf16>
    %3 = vector.extract_strided_slice %1 {offsets = [0, 1, 0], sizes = [16, 16, 128], strides = [1, 1, 1]} : vector<18x18x128xbf16> to vector<16x16x128xbf16>
    %4 = vector.extract_strided_slice %1 {offsets = [0, 2, 0], sizes = [16, 16, 128], strides = [1, 1, 1]} : vector<18x18x128xbf16> to vector<16x16x128xbf16>
    %5 = vector.extract_strided_slice %1 {offsets = [1, 0, 0], sizes = [16, 16, 128], strides = [1, 1, 1]} : vector<18x18x128xbf16> to vector<16x16x128xbf16>
    %6 = vector.extract_strided_slice %1 {offsets = [1, 1, 0], sizes = [16, 16, 128], strides = [1, 1, 1]} : vector<18x18x128xbf16> to vector<16x16x128xbf16>
    %7 = vector.extract_strided_slice %1 {offsets = [1, 2, 0], sizes = [16, 16, 128], strides = [1, 1, 1]} : vector<18x18x128xbf16> to vector<16x16x128xbf16>
    %8 = vector.extract_strided_slice %1 {offsets = [2, 0, 0], sizes = [16, 16, 128], strides = [1, 1, 1]} : vector<18x18x128xbf16> to vector<16x16x128xbf16>
    %9 = vector.extract_strided_slice %1 {offsets = [2, 1, 0], sizes = [16, 16, 128], strides = [1, 1, 1]} : vector<18x18x128xbf16> to vector<16x16x128xbf16>
    %10 = vector.extract_strided_slice %1 {offsets = [2, 2, 0], sizes = [16, 16, 128], strides = [1, 1, 1]} : vector<18x18x128xbf16> to vector<16x16x128xbf16>
    %11 = tpu.concatenate %2, %3, %4, %5, %6, %7, %8, %9, %10 in 2 : vector<16x16x128xbf16>, vector<16x16x128xbf16>, vector<16x16x128xbf16>, vector<16x16x128xbf16>, vector<16x16x128xbf16>, vector<16x16x128xbf16>, vector<16x16x128xbf16>, vector<16x16x128xbf16>, vector<16x16x128xbf16> -> vector<16x16x1152xbf16>
    %12 = vector.shape_cast %11 : vector<16x16x1152xbf16> to vector<256x1152xbf16>
    %c0_3 = arith.constant 0 : index
    %c0_4 = arith.constant 0 : index
    %13 = vector.load %arg2[%c0_3, %c0_4] : memref<1152x128xbf16, #tpu.memory_space<vmem>>, vector<1152x128xbf16>
    %cst = arith.constant dense<0.000000e+00> : vector<256x128xf32>
    %14 = tpu.matmul %12, %13, %cst {dimension_numbers = #tpu.dot_dimension_numbers<[1], [0], [0], [1], [0, 0, 1, 1], [], []>} : vector<256x1152xbf16>, vector<1152x128xbf16>, vector<256x128xf32> -> vector<256x128xf32>
    %c0_5 = arith.constant 0 : index
    %c0_6 = arith.constant 0 : index
    %15 = vector.load %arg3[%c0_5, %c0_6] : memref<1x128xf32, #tpu.memory_space<vmem>>, vector<1x128xf32>
    %16 = vector.broadcast %15 : vector<1x128xf32> to vector<256x128xf32>
    %17 = arith.mulf %14, %16 : vector<256x128xf32>
    %c0_7 = arith.constant 0 : index
    %c0_8 = arith.constant 0 : index
    %18 = vector.load %arg4[%c0_7, %c0_8] : memref<1x128xf32, #tpu.memory_space<vmem>>, vector<1x128xf32>
    %19 = vector.broadcast %18 : vector<1x128xf32> to vector<256x128xf32>
    %20 = arith.addf %17, %19 : vector<256x128xf32>
    %cst_9 = arith.constant 0.000000e+00 : f32
    %21 = vector.broadcast %cst_9 : f32 to vector<256x128xf32>
    %22 = arith.maximumf %20, %21 : vector<256x128xf32>
    %c0_10 = arith.constant 0 : index
    %c0_11 = arith.constant 0 : index
    %c0_12 = arith.constant 0 : index
    %23 = vector.load %arg5[%c0_10, %c0_11, %c0_12] : memref<1x256x128xf32, #tpu.memory_space<vmem>>, vector<1x256x128xf32>
    %24 = vector.shape_cast %23 : vector<1x256x128xf32> to vector<256x128xf32>
    %25 = vector.shape_cast %22 : vector<256x128xf32> to vector<1x256x128xf32>
    tpu.vector_store %arg5[%c0_10, %c0_11, %c0_12], %25 {strides = array<i32>} : memref<1x256x128xf32, #tpu.memory_space<vmem>>, vector<1x256x128xf32>,
    return
  }
  func.func @transform_0(%arg0: i32) -> (i32, i32, i32, i32) {
    %c0_i32 = arith.constant 0 : i32
    %c0_i32_0 = arith.constant 0 : i32
    %c0_i32_1 = arith.constant 0 : i32
    %c0_i32_2 = arith.constant 0 : i32
    return %arg0, %c0_i32, %c0_i32_0, %c0_i32_1 : i32, i32, i32, i32
  }
  func.func @transform_1(%arg0: i32) -> (i32, i32) {
    %c0_i32 = arith.constant 0 : i32
    %c0_i32_0 = arith.constant 0 : i32
    %c0_i32_1 = arith.constant 0 : i32
    return %c0_i32, %c0_i32_0 : i32, i32
  }
  func.func @transform_2(%arg0: i32) -> (i32, i32) {
    %c0_i32 = arith.constant 0 : i32
    %c0_i32_0 = arith.constant 0 : i32
    %c0_i32_1 = arith.constant 0 : i32
    return %c0_i32, %c0_i32_0 : i32, i32
  }
  func.func @transform_3(%arg0: i32) -> (i32, i32) {
    %c0_i32 = arith.constant 0 : i32
    %c0_i32_0 = arith.constant 0 : i32
    %c0_i32_1 = arith.constant 0 : i32
    return %c0_i32, %c0_i32_0 : i32, i32
  }
  func.func @transform_4(%arg0: i32) -> (i32, i32, i32) {
    %c0_i32 = arith.constant 0 : i32
    %c0_i32_0 = arith.constant 0 : i32
    %c0_i32_1 = arith.constant 0 : i32
    return %arg0, %c0_i32, %c0_i32_0 : i32, i32, i32
  }
}

</mosaic_0001>

<llo_original>
// kernel: tpu_custom_call.1
$region0: #{tpu_custom_call.1}
  #allocation0 [shape = 'u32[]', space=smem, size = 0x4, offset = 0x4, fixed_abs, tag = 'smem constant byte address 0x4 - core index']
  #allocation1 [shape = 'u32[144,128]{1,0:T(1,128)}', space=vmem, size = 0x12000, scoped, tag = 'internal scratch']
  %s0 = inlined_call_operand.vmem [shape: bf16[2,18,18,128], index: 0, kind: input, shape index: {}]
  %s1 = inlined_call_operand.vmem [shape: bf16[1152,128], index: 1, kind: input, shape index: {}]
  %s2 = inlined_call_operand.vmem [shape: f32[1,128], index: 2, kind: input, shape index: {}]
  %s3 = inlined_call_operand.vmem [shape: f32[1,128], index: 3, kind: input, shape index: {}]
  %s4 = inlined_call_operand.hbm [shape: f32[2,256,128], index: 4, kind: output, shape index: {}]
  %s5 = sld [smem:[#allocation0]]
  $region49: #{tpu_custom_call.1} parent=0
    _
  %s7 = ssub.s32 1, %s5
  %s8 = scalar_select 0, %s7, %s5
  $region1: #{tpu_custom_call.1} parent=0
    #allocation2 [shape = 'u8[262144]{0}', space=vmem, size = 0x40000, scoped, tag = 'output window, operand 0']
    #allocation3 [shape = 's32[2]{0}', space=sflag, size = 0x8, scoped, tag = 'scoped memory for tpu_custom_call.1']
    %9 = vsyncpa [#allocation3], 0
    %s10 = scalar_lea.sflag [#allocation3], 1
    %11 = vsyncpa %s10, 0
    loop: start=0, step=1, limit=4
    $region2: #{tpu_custom_call.1} parent=1 // loop_pre_header
      _
    $region3: #{tpu_custom_call.1} parent=1 // loop_header
      %s13 = sphi 0, %s17
      %p14 = scmp.ge.s32.totalorder %s13, 4
      %s23 = sphi 0, %s25
      %s26 = sphi 0, %s23
      %s27 = sphi 0, %s26
      %s43 = sphi 0, %s27
      %s47 = sphi 0, %s47
      %s49 = sphi 0, %s47
      %s50 = sphi 0, %s49
      %s64 = sphi 0, %s50
      %s68 = sphi 0, %s68
      %s70 = sphi 0, %s68
      %s71 = sphi 0, %s70
      %s85 = sphi 0, %s71
      %s89 = sphi 0, %s89
      %s91 = sphi 0, %s89
      %s92 = sphi 0, %s91
      %s106 = sphi 0, %s92
      %s112 = sphi 0, %s114
      %s115 = sphi 0, %s112
      %s116 = sphi 0, %s115
      %s132 = sphi 0, %s116
    $region4: #{tpu_custom_call.1} parent=1 // loop_header_branch
      %16 = sbr.rel (%p14) target = $region8
    $region5: #{tpu_custom_call.1} parent=1 // loop_body
      %s18 = ssub.s32 %s13, 1
      %s19 = ssub.s32 %s13, 2
      %s20 = sadd.s32 %s13, 1
      %s21 = ssub.s32 %s13, %s20
      %p22 = scmp.eq.s32.totalorder %s21, 0
      %s24 = sadd.s32 %s23, 1
      %s25 = scalar_select %p22, %s23, %s24
      %p28 = pneg %p22
      %p29 = scmp.eq.s32.totalorder %s13, 1
      %p30 = por %p28, %p29
      %p31 = scmp.ne.s32.totalorder %s23, %s26
      %p32 = scmp.eq.s32.totalorder %s13, 0
      %p33 = por %p31, %p32
      %p34 = scmp.ne.s32.totalorder %s23, %s26
      %p35 = scmp.eq.s32.totalorder %s18, 1
      %p36 = por %p34, %p35
      %p37 = scmp.ne.s32.totalorder %s26, %s27
      %p38 = scmp.eq.s32.totalorder %s18, 0
      %p39 = por %p37, %p38
      %p40 = scmp.ne.s32.totalorder %s26, %s27
      %p41 = scmp.eq.s32.totalorder %s19, 1
      %p42 = por %p40, %p41
      %p44 = scmp.ne.s32.totalorder %s27, %s43
      %p45 = scmp.eq.s32.totalorder %s19, 0
      %p46 = por %p44, %p45
      %s48 = sadd.s32 %s47, 1
      %p51 = scmp.eq.s32.totalorder %s13, 1
      %p52 = scmp.ne.s32.totalorder %s47, %s49
      %p53 = scmp.eq.s32.totalorder %s13, 0
      %p54 = por %p52, %p53
      %p55 = scmp.ne.s32.totalorder %s47, %s49
      %p56 = scmp.eq.s32.totalorder %s18, 1
      %p57 = por %p55, %p56
      %p58 = scmp.ne.s32.totalorder %s49, %s50
      %p59 = scmp.eq.s32.totalorder %s18, 0
      %p60 = por %p58, %p59
      %p61 = scmp.ne.s32.totalorder %s49, %s50
      %p62 = scmp.eq.s32.totalorder %s19, 1
      %p63 = por %p61, %p62
      %p65 = scmp.ne.s32.totalorder %s50, %s64
      %p66 = scmp.eq.s32.totalorder %s19, 0
      %p67 = por %p65, %p66
      %s69 = sadd.s32 %s68, 1
      %p72 = scmp.eq.s32.totalorder %s13, 1
      %p73 = scmp.ne.s32.totalorder %s68, %s70
      %p74 = scmp.eq.s32.totalorder %s13, 0
      %p75 = por %p73, %p74
      %p76 = scmp.ne.s32.totalorder %s68, %s70
      %p77 = scmp.eq.s32.totalorder %s18, 1
      %p78 = por %p76, %p77
      %p79 = scmp.ne.s32.totalorder %s70, %s71
      %p80 = scmp.eq.s32.totalorder %s18, 0
      %p81 = por %p79, %p80
      %p82 = scmp.ne.s32.totalorder %s70, %s71
      %p83 = scmp.eq.s32.totalorder %s19, 1
      %p84 = por %p82, %p83
      %p86 = scmp.ne.s32.totalorder %s71, %s85
      %p87 = scmp.eq.s32.totalorder %s19, 0
      %p88 = por %p86, %p87
      %s90 = sadd.s32 %s89, 1
      %p93 = scmp.eq.s32.totalorder %s13, 1
      %p94 = scmp.ne.s32.totalorder %s89, %s91
      %p95 = scmp.eq.s32.totalorder %s13, 0
      %p96 = por %p94, %p95
      %p97 = scmp.ne.s32.totalorder %s89, %s91
      %p98 = scmp.eq.s32.totalorder %s18, 1
      %p99 = por %p97, %p98
      %p100 = scmp.ne.s32.totalorder %s91, %s92
      %p101 = scmp.eq.s32.totalorder %s18, 0
      %p102 = por %p100, %p101
      %p103 = scmp.ne.s32.totalorder %s91, %s92
      %p104 = scmp.eq.s32.totalorder %s19, 1
      %p105 = por %p103, %p104
      %p107 = scmp.ne.s32.totalorder %s92, %s106
      %p108 = scmp.eq.s32.totalorder %s19, 0
      %p109 = por %p107, %p108
      %s110 = ssub.s32 %s13, %s20
      %p111 = scmp.eq.s32.totalorder %s110, 0
      %s113 = sadd.s32 %s112, 1
      %s114 = scalar_select %p111, %s112, %s113
      %p117 = pneg %p111
      %p118 = scmp.eq.s32.totalorder %s13, 1
      %p119 = por %p117, %p118
      %p120 = scmp.ne.s32.totalorder %s112, %s115
      %p121 = scmp.eq.s32.totalorder %s13, 0
      %p122 = por %p120, %p121
      %p123 = scmp.ne.s32.totalorder %s112, %s115
      %p124 = scmp.eq.s32.totalorder %s18, 1
      %p125 = por %p123, %p124
      %p126 = scmp.ne.s32.totalorder %s115, %s116
      %p127 = scmp.eq.s32.totalorder %s18, 0
      %p128 = por %p126, %p127
      %p129 = scmp.ne.s32.totalorder %s115, %s116
      %p130 = scmp.eq.s32.totalorder %s19, 1
      %p131 = por %p129, %p130
      %p133 = scmp.ne.s32.totalorder %s116, %s132
      %p134 = scmp.eq.s32.totalorder %s19, 0
      %p135 = por %p133, %p134
      %p136 = scmp.le.s32.totalorder 1, %s13
      %p137 = scmp.lt.s32.totalorder %s13, 3
      %p138 = pnand %p136, %p137
      %p139 = pneg %p138
      // Predicated region
      $region9: #{tpu_custom_call.1} parent=5 // pred_check
        _
      $region10: #{tpu_custom_call.1} parent=5 // pred_check_branch
        %141 = sbr.rel (%p138) target = $region12
      $region11: #{tpu_custom_call.1} parent=5 // pred_region
        %s142 = ssub.s32 %s13, 1
        // Predicated region
        $region13: #{tpu_custom_call.1} parent=11 // pred_check
          %p143 = pneg %p60
        $region14: #{tpu_custom_call.1} parent=11 // pred_check_branch
          %145 = sbr.rel (%p143) target = $region16
        $region15: #{tpu_custom_call.1} parent=11 // pred_region
          _
        $region16: #{tpu_custom_call.1} parent=11 // pred_fallthru
          _
        // Predicated region
        $region17: #{tpu_custom_call.1} parent=11 // pred_check
          %p146 = pneg %p81
        $region18: #{tpu_custom_call.1} parent=11 // pred_check_branch
          %148 = sbr.rel (%p146) target = $region20
        $region19: #{tpu_custom_call.1} parent=11 // pred_region
          _
        $region20: #{tpu_custom_call.1} parent=11 // pred_fallthru
          _
        // Predicated region
        $region21: #{tpu_custom_call.1} parent=11 // pred_check
          %p149 = pneg %p102
        $region22: #{tpu_custom_call.1} parent=11 // pred_check_branch
          %151 = sbr.rel (%p149) target = $region24
        $region23: #{tpu_custom_call.1} parent=11 // pred_region
          _
        $region24: #{tpu_custom_call.1} parent=11 // pred_fallthru
          _
      $region12: #{tpu_custom_call.1} parent=5 // pred_fallthru
        _
      %p152 = scmp.lt.s32.totalorder %s13, 2
      // Predicated region
      $region25: #{tpu_custom_call.1} parent=5 // pred_check
        %p153 = pneg %p152
      $region26: #{tpu_custom_call.1} parent=5 // pred_check_branch
        %155 = sbr.rel (%p153) target = $region28
      $region27: #{tpu_custom_call.1} parent=5 // pred_region
        // Predicated region
        $region29: #{tpu_custom_call.1} parent=27 // pred_check
          %p156 = pneg %p33
        $region30: #{tpu_custom_call.1} parent=27 // pred_check_branch
          %158 = sbr.rel (%p156) target = $region32
        $region31: #{tpu_custom_call.1} parent=27 // pred_region
          %p159 = scmp.lt.s32.totalorder %s13, 1
          %s160 = scalar_select %p159, %s13, 1
          %s161 = smul.addr %s160, 54
          %s162 = smul.addr %s161, 4
          %s163 = scalar_lea.vmem %s0, %s162
        $region32: #{tpu_custom_call.1} parent=27 // pred_fallthru
          _
      $region28: #{tpu_custom_call.1} parent=5 // pred_fallthru
        _
      %p164 = scmp.le.s32.totalorder 1, %s13
      %p165 = scmp.lt.s32.totalorder %s13, 3
      %p166 = pnand %p164, %p165
      %p167 = pneg %p166
      // Predicated region
      $region33: #{tpu_custom_call.1} parent=5 // pred_check
        _
      $region34: #{tpu_custom_call.1} parent=5 // pred_check_branch
        %169 = sbr.rel (%p166) target = $region36
      $region35: #{tpu_custom_call.1} parent=5 // pred_region
        %s170 = ssub.s32 %s13, 1
        %p171 = scmp.lt.s32.totalorder %s18, 1
        %s172 = scalar_select %p171, %s18, 1
        %s173 = smul.addr %s172, 54
        %s174 = smul.addr %s173, 4
        %s175 = scalar_lea.vmem %s0, %s174
        %p176 = pneg %p39
        %p177 = pneg %p36
        %p178 = pneg %p60
        %p179 = pneg %p57
        %p180 = pneg %p81
        %p181 = pneg %p78
        %p182 = pneg %p102
        %p183 = pneg %p99
        %p184 = pneg %p128
        %p185 = pneg %p125
        %s186 = sand.u32 %s115, 1
        %s187 = scalar_lea.sflag [#allocation3], %s186
        %s188 = sand.u32 %s115, 1
        %s189 = smul.addr %s188, 256
        %s190 = scalar_lea.vmem [#allocation2], %s189
        %p191 = scmp.lt.s32.totalorder %s18, 1
        %s192 = scalar_select %p191, %s18, 1
        %s193 = smul.addr %s192, 54
        %s194 = smul.addr %s193, 4
        %s195 = scalar_lea.vmem %s0, %s194
        %v197 = vld [vmem:[%s195] sm:$0xf]
        %v198 = vld [vmem:[%s195 + $0x4] sm:$0xf]
        %v199 = vld [vmem:[%s195 + $0x8] sm:$0x1]
        %v200 = vld [vmem:[%s195 + $0xc] sm:$0xf]
        %v201 = vld [vmem:[%s195 + $0x10] sm:$0xf]
        %v202 = vld [vmem:[%s195 + $0x14] sm:$0x1]
        %v203 = vld [vmem:[%s195 + $0x18] sm:$0xf]
        %v204 = vld [vmem:[%s195 + $0x1c] sm:$0xf]
        %v205 = vld [vmem:[%s195 + $0x20] sm:$0x1]
        %v206 = vld [vmem:[%s195 + $0x24] sm:$0xf]
        %v207 = vld [vmem:[%s195 + $0x28] sm:$0xf]
        %v208 = vld [vmem:[%s195 + $0x2c] sm:$0x1]
        %v209 = vld [vmem:[%s195 + $0x30] sm:$0xf]
        %v210 = vld [vmem:[%s195 + $0x34] sm:$0xf]
        %v211 = vld [vmem:[%s195 + $0x38] sm:$0x1]
        %v212 = vld [vmem:[%s195 + $0x3c] sm:$0xf]
        %v213 = vld [vmem:[%s195 + $0x40] sm:$0xf]
        %v214 = vld [vmem:[%s195 + $0x44] sm:$0x1]
        %v215 = vld [vmem:[%s195 + $0x48] sm:$0xf]
        %v216 = vld [vmem:[%s195 + $0x4c] sm:$0xf]
        %v217 = vld [vmem:[%s195 + $0x50] sm:$0x1]
        %v218 = vld [vmem:[%s195 + $0x54] sm:$0xf]
        %v219 = vld [vmem:[%s195 + $0x58] sm:$0xf]
        %v220 = vld [vmem:[%s195 + $0x5c] sm:$0x1]
        %v221 = vld [vmem:[%s195 + $0x60] sm:$0xf]
        %v222 = vld [vmem:[%s195 + $0x64] sm:$0xf]
        %v223 = vld [vmem:[%s195 + $0x68] sm:$0x1]
        %v224 = vld [vmem:[%s195 + $0x6c] sm:$0xf]
        %v225 = vld [vmem:[%s195 + $0x70] sm:$0xf]
        %v226 = vld [vmem:[%s195 + $0x74] sm:$0x1]
        %v227 = vld [vmem:[%s195 + $0x78] sm:$0xf]
        %v228 = vld [vmem:[%s195 + $0x7c] sm:$0xf]
        %v229 = vld [vmem:[%s195 + $0x80] sm:$0x1]
        %v230 = vld [vmem:[%s195 + $0x84] sm:$0xf]
        %v231 = vld [vmem:[%s195 + $0x88] sm:$0xf]
        %v232 = vld [vmem:[%s195 + $0x8c] sm:$0x1]
        %v233 = vld [vmem:[%s195 + $0x90] sm:$0xf]
        %v234 = vld [vmem:[%s195 + $0x94] sm:$0xf]
        %v235 = vld [vmem:[%s195 + $0x98] sm:$0x1]
        %v236 = vld [vmem:[%s195 + $0x9c] sm:$0xf]
        %v237 = vld [vmem:[%s195 + $0xa0] sm:$0xf]
        %v238 = vld [vmem:[%s195 + $0xa4] sm:$0x1]
        %v239 = vld [vmem:[%s195 + $0xa8] sm:$0xf]
        %v240 = vld [vmem:[%s195 + $0xac] sm:$0xf]
        %v241 = vld [vmem:[%s195 + $0xb0] sm:$0x1]
        %v242 = vld [vmem:[%s195 + $0xb4] sm:$0xf]
        %v243 = vld [vmem:[%s195 + $0xb8] sm:$0xf]
        %v244 = vld [vmem:[%s195 + $0xbc] sm:$0x1]
        %v245 = vld [vmem:[%s195 + $0xc0] sm:$0xf]
        %v246 = vld [vmem:[%s195 + $0xc4] sm:$0xf]
        %v247 = vld [vmem:[%s195 + $0xc8] sm:$0x1]
        %v248 = vld [vmem:[%s195 + $0xcc] sm:$0xf]
        %v249 = vld [vmem:[%s195 + $0xd0] sm:$0xf]
        %v250 = vld [vmem:[%s195 + $0xd4] sm:$0x1]
        %v283 = vunpack.c.l.b16 %v197
        %v284 = vunpack.c.l.b16 %v198
        %v285 = vunpack.c.l.b16 %v200
        %v286 = vunpack.c.l.b16 %v201
        %v287 = vunpack.c.l.b16 %v203
        %v288 = vunpack.c.l.b16 %v204
        %v289 = vunpack.c.l.b16 %v206
        %v290 = vunpack.c.l.b16 %v207
        %v291 = vunpack.c.l.b16 %v209
        %v292 = vunpack.c.l.b16 %v210
        %v293 = vunpack.c.l.b16 %v212
        %v294 = vunpack.c.l.b16 %v213
        %v295 = vunpack.c.l.b16 %v215
        %v296 = vunpack.c.l.b16 %v216
        %v297 = vunpack.c.l.b16 %v218
        %v298 = vunpack.c.l.b16 %v219
        %v299 = vunpack.c.l.b16 %v221
        %v300 = vunpack.c.l.b16 %v222
        %v301 = vunpack.c.l.b16 %v224
        %v302 = vunpack.c.l.b16 %v225
        %v303 = vunpack.c.l.b16 %v227
        %v304 = vunpack.c.l.b16 %v228
        %v305 = vunpack.c.l.b16 %v230
        %v306 = vunpack.c.l.b16 %v231
        %v307 = vunpack.c.l.b16 %v233
        %v308 = vunpack.c.l.b16 %v234
        %v309 = vunpack.c.l.b16 %v236
        %v310 = vunpack.c.l.b16 %v237
        %v311 = vunpack.c.l.b16 %v239
        %v312 = vunpack.c.l.b16 %v240
        %v313 = vunpack.c.l.b16 %v242
        %v314 = vunpack.c.l.b16 %v243
        %v315 = vpack.c.b16 %v284, %v283
        %v316 = vpack.c.b16 %v286, %v285
        %v317 = vpack.c.b16 %v288, %v287
        %v318 = vpack.c.b16 %v290, %v289
        %v319 = vpack.c.b16 %v292, %v291
        %v320 = vpack.c.b16 %v294, %v293
        %v321 = vpack.c.b16 %v296, %v295
        %v322 = vpack.c.b16 %v298, %v297
        %v323 = vpack.c.b16 %v300, %v299
        %v324 = vpack.c.b16 %v302, %v301
        %v325 = vpack.c.b16 %v304, %v303
        %v326 = vpack.c.b16 %v306, %v305
        %v327 = vpack.c.b16 %v308, %v307
        %v328 = vpack.c.b16 %v310, %v309
        %v329 = vpack.c.b16 %v312, %v311
        %v330 = vpack.c.b16 %v314, %v313
        %v363 = vunpack.c.l.b16 %v199
        %v364 = vunpack.c.l.b16 %v202
        %v365 = vunpack.c.l.b16 %v205
        %v366 = vunpack.c.l.b16 %v208
        %v367 = vunpack.c.l.b16 %v211
        %v368 = vunpack.c.l.b16 %v214
        %v369 = vunpack.c.l.b16 %v217
        %v370 = vunpack.c.l.b16 %v220
        %v371 = vunpack.c.l.b16 %v223
        %v372 = vunpack.c.l.b16 %v226
        %v373 = vunpack.c.l.b16 %v229
        %v374 = vunpack.c.l.b16 %v232
        %v375 = vunpack.c.l.b16 %v235
        %v376 = vunpack.c.l.b16 %v238
        %v377 = vunpack.c.l.b16 %v241
        %v378 = vunpack.c.l.b16 %v244
        %v379 = vpack.c.b16 %v363, %v363
        %v380 = vpack.c.b16 %v364, %v364
        %v381 = vpack.c.b16 %v365, %v365
        %v382 = vpack.c.b16 %v366, %v366
        %v383 = vpack.c.b16 %v367, %v367
        %v384 = vpack.c.b16 %v368, %v368
        %v385 = vpack.c.b16 %v369, %v369
        %v386 = vpack.c.b16 %v370, %v370
        %v387 = vpack.c.b16 %v371, %v371
        %v388 = vpack.c.b16 %v372, %v372
        %v389 = vpack.c.b16 %v373, %v373
        %v390 = vpack.c.b16 %v374, %v374
        %v391 = vpack.c.b16 %v375, %v375
        %v392 = vpack.c.b16 %v376, %v376
        %v393 = vpack.c.b16 %v377, %v377
        %v394 = vpack.c.b16 %v378, %v378
        %vm395 = vsmask.f32 7424
        %v397 = vshrl.u32 %v315, 16
        %v399 = vshll.u32 %v315, 16
        %v401 = vrot.slane %v399, 1
        %v402 = vor.u32 %v397, %v401
        %v404 = vshll.u32 %v379, 16
        %v406 = vrot.slane %v404, 1
        %v407 = vsel %vm395, %v402, %v406
        %v409 = vshrl.u32 %v316, 16
        %v411 = vshll.u32 %v316, 16
        %v413 = vrot.slane %v411, 1
        %v414 = vor.u32 %v409, %v413
        %v416 = vshll.u32 %v380, 16
        %v418 = vrot.slane %v416, 1
        %v419 = vsel %vm395, %v414, %v418
        %v421 = vshrl.u32 %v317, 16
        %v423 = vshll.u32 %v317, 16
        %v425 = vrot.slane %v423, 1
        %v426 = vor.u32 %v421, %v425
        %v428 = vshll.u32 %v381, 16
        %v430 = vrot.slane %v428, 1
        %v431 = vsel %vm395, %v426, %v430
        %v433 = vshrl.u32 %v318, 16
        %v435 = vshll.u32 %v318, 16
        %v437 = vrot.slane %v435, 1
        %v438 = vor.u32 %v433, %v437
        %v440 = vshll.u32 %v382, 16
        %v442 = vrot.slane %v440, 1
        %v443 = vsel %vm395, %v438, %v442
        %v445 = vshrl.u32 %v319, 16
        %v447 = vshll.u32 %v319, 16
        %v449 = vrot.slane %v447, 1
        %v450 = vor.u32 %v445, %v449
        %v452 = vshll.u32 %v383, 16
        %v454 = vrot.slane %v452, 1
        %v455 = vsel %vm395, %v450, %v454
        %v457 = vshrl.u32 %v320, 16
        %v459 = vshll.u32 %v320, 16
        %v461 = vrot.slane %v459, 1
        %v462 = vor.u32 %v457, %v461
        %v464 = vshll.u32 %v384, 16
        %v466 = vrot.slane %v464, 1
        %v467 = vsel %vm395, %v462, %v466
        %v469 = vshrl.u32 %v321, 16
        %v471 = vshll.u32 %v321, 16
        %v473 = vrot.slane %v471, 1
        %v474 = vor.u32 %v469, %v473
        %v476 = vshll.u32 %v385, 16
        %v478 = vrot.slane %v476, 1
        %v479 = vsel %vm395, %v474, %v478
        %v481 = vshrl.u32 %v322, 16
        %v483 = vshll.u32 %v322, 16
        %v485 = vrot.slane %v483, 1
        %v486 = vor.u32 %v481, %v485
        %v488 = vshll.u32 %v386, 16
        %v490 = vrot.slane %v488, 1
        %v491 = vsel %vm395, %v486, %v490
        %v493 = vshrl.u32 %v323, 16
        %v495 = vshll.u32 %v323, 16
        %v497 = vrot.slane %v495, 1
        %v498 = vor.u32 %v493, %v497
        %v500 = vshll.u32 %v387, 16
        %v502 = vrot.slane %v500, 1
        %v503 = vsel %vm395, %v498, %v502
        %v505 = vshrl.u32 %v324, 16
        %v507 = vshll.u32 %v324, 16
        %v509 = vrot.slane %v507, 1
        %v510 = vor.u32 %v505, %v509
        %v512 = vshll.u32 %v388, 16
        %v514 = vrot.slane %v512, 1
        %v515 = vsel %vm395, %v510, %v514
        %v517 = vshrl.u32 %v325, 16
        %v519 = vshll.u32 %v325, 16
        %v521 = vrot.slane %v519, 1
        %v522 = vor.u32 %v517, %v521
        %v524 = vshll.u32 %v389, 16
        %v526 = vrot.slane %v524, 1
        %v527 = vsel %vm395, %v522, %v526
        %v529 = vshrl.u32 %v326, 16
        %v531 = vshll.u32 %v326, 16
        %v533 = vrot.slane %v531, 1
        %v534 = vor.u32 %v529, %v533
        %v536 = vshll.u32 %v390, 16
        %v538 = vrot.slane %v536, 1
        %v539 = vsel %vm395, %v534, %v538
        %v541 = vshrl.u32 %v327, 16
        %v543 = vshll.u32 %v327, 16
        %v545 = vrot.slane %v543, 1
        %v546 = vor.u32 %v541, %v545
        %v548 = vshll.u32 %v391, 16
        %v550 = vrot.slane %v548, 1
        %v551 = vsel %vm395, %v546, %v550
        %v553 = vshrl.u32 %v328, 16
        %v555 = vshll.u32 %v328, 16
        %v557 = vrot.slane %v555, 1
        %v558 = vor.u32 %v553, %v557
        %v560 = vshll.u32 %v392, 16
        %v562 = vrot.slane %v560, 1
        %v563 = vsel %vm395, %v558, %v562
        %v565 = vshrl.u32 %v329, 16
        %v567 = vshll.u32 %v329, 16
        %v569 = vrot.slane %v567, 1
        %v570 = vor.u32 %v565, %v569
        %v572 = vshll.u32 %v393, 16
        %v574 = vrot.slane %v572, 1
        %v575 = vsel %vm395, %v570, %v574
        %v577 = vshrl.u32 %v330, 16
        %v579 = vshll.u32 %v330, 16
        %v581 = vrot.slane %v579, 1
        %v582 = vor.u32 %v577, %v581
        %v584 = vshll.u32 %v394, 16
        %v586 = vrot.slane %v584, 1
        %v587 = vsel %vm395, %v582, %v586
        %vm604 = vcmask 1046528
        %v605 = vrot.slane %v315, 1
        %v606 = vrot.slane %v379, 1
        %v607 = vsel %vm604, %v605, %v606
        %v608 = vrot.slane %v316, 1
        %v609 = vrot.slane %v380, 1
        %v610 = vsel %vm604, %v608, %v609
        %v611 = vrot.slane %v317, 1
        %v612 = vrot.slane %v381, 1
        %v613 = vsel %vm604, %v611, %v612
        %v614 = vrot.slane %v318, 1
        %v615 = vrot.slane %v382, 1
        %v616 = vsel %vm604, %v614, %v615
        %v617 = vrot.slane %v319, 1
        %v618 = vrot.slane %v383, 1
        %v619 = vsel %vm604, %v617, %v618
        %v620 = vrot.slane %v320, 1
        %v621 = vrot.slane %v384, 1
        %v622 = vsel %vm604, %v620, %v621
        %v623 = vrot.slane %v321, 1
        %v624 = vrot.slane %v385, 1
        %v625 = vsel %vm604, %v623, %v624
        %v626 = vrot.slane %v322, 1
        %v627 = vrot.slane %v386, 1
        %v628 = vsel %vm604, %v626, %v627
        %v629 = vrot.slane %v323, 1
        %v630 = vrot.slane %v387, 1
        %v631 = vsel %vm604, %v629, %v630
        %v632 = vrot.slane %v324, 1
        %v633 = vrot.slane %v388, 1
        %v634 = vsel %vm604, %v632, %v633
        %v635 = vrot.slane %v325, 1
        %v636 = vrot.slane %v389, 1
        %v637 = vsel %vm604, %v635, %v636
        %v638 = vrot.slane %v326, 1
        %v639 = vrot.slane %v390, 1
        %v640 = vsel %vm604, %v638, %v639
        %v641 = vrot.slane %v327, 1
        %v642 = vrot.slane %v391, 1
        %v643 = vsel %vm604, %v641, %v642
        %v644 = vrot.slane %v328, 1
        %v645 = vrot.slane %v392, 1
        %v646 = vsel %vm604, %v644, %v645
        %v647 = vrot.slane %v329, 1
        %v648 = vrot.slane %v393, 1
        %v649 = vsel %vm604, %v647, %v648
        %v650 = vrot.slane %v330, 1
        %v651 = vrot.slane %v394, 1
        %v652 = vsel %vm604, %v650, %v651
        %v671 = vunpack.c.l.b16 %v245
        %v672 = vunpack.c.l.b16 %v246
        %v673 = vpack.c.b16 %v672, %v671
        %v676 = vunpack.c.l.b16 %v247
        %v677 = vpack.c.b16 %v676, %v676
        %v679 = vshrl.u32 %v673, 16
        %v681 = vshll.u32 %v673, 16
        %v683 = vrot.slane %v681, 1
        %v684 = vor.u32 %v679, %v683
        %v686 = vshll.u32 %v677, 16
        %v688 = vrot.slane %v686, 1
        %v689 = vsel %vm395, %v684, %v688
        %v691 = vrot.slane %v673, 1
        %v692 = vrot.slane %v677, 1
        %v693 = vsel %vm604, %v691, %v692
        %v697 = vunpack.c.l.b16 %v248
        %v698 = vunpack.c.l.b16 %v249
        %v699 = vpack.c.b16 %v698, %v697
        %v702 = vunpack.c.l.b16 %v250
        %v703 = vpack.c.b16 %v702, %v702
        %v705 = vshrl.u32 %v699, 16
        %v707 = vshll.u32 %v699, 16
        %v709 = vrot.slane %v707, 1
        %v710 = vor.u32 %v705, %v709
        %v712 = vshll.u32 %v703, 16
        %v714 = vrot.slane %v712, 1
        %v715 = vsel %vm395, %v710, %v714
        %v717 = vrot.slane %v699, 1
        %v718 = vrot.slane %v703, 1
        %v719 = vsel %vm604, %v717, %v718
        %v721 = vld [vmem:[%s1] sm:$0xf]
        %v722 = vld [vmem:[%s1 + $0x4] sm:$0xf]
        %v723 = vld [vmem:[%s1 + $0x8] sm:$0xf]
        %v724 = vld [vmem:[%s1 + $0xc] sm:$0xf]
        %v725 = vld [vmem:[%s1 + $0x10] sm:$0xf]
        %v726 = vld [vmem:[%s1 + $0x14] sm:$0xf]
        %v727 = vld [vmem:[%s1 + $0x18] sm:$0xf]
        %v728 = vld [vmem:[%s1 + $0x1c] sm:$0xf]
        %v729 = vld [vmem:[%s1 + $0x20] sm:$0xf]
        %v730 = vld [vmem:[%s1 + $0x24] sm:$0xf]
        %v731 = vld [vmem:[%s1 + $0x28] sm:$0xf]
        %v732 = vld [vmem:[%s1 + $0x2c] sm:$0xf]
        %v733 = vld [vmem:[%s1 + $0x30] sm:$0xf]
        %v734 = vld [vmem:[%s1 + $0x34] sm:$0xf]
        %v735 = vld [vmem:[%s1 + $0x38] sm:$0xf]
        %v736 = vld [vmem:[%s1 + $0x3c] sm:$0xf]
        %v737 = vld [vmem:[%s1 + $0x40] sm:$0xf]
        %v738 = vld [vmem:[%s1 + $0x44] sm:$0xf]
        %v739 = vld [vmem:[%s1 + $0x48] sm:$0xf]
        %v740 = vld [vmem:[%s1 + $0x4c] sm:$0xf]
        %v741 = vld [vmem:[%s1 + $0x50] sm:$0xf]
        %v742 = vld [vmem:[%s1 + $0x54] sm:$0xf]
        %v743 = vld [vmem:[%s1 + $0x58] sm:$0xf]
        %v744 = vld [vmem:[%s1 + $0x5c] sm:$0xf]
        %v745 = vld [vmem:[%s1 + $0x60] sm:$0xf]
        %v746 = vld [vmem:[%s1 + $0x64] sm:$0xf]
        %v747 = vld [vmem:[%s1 + $0x68] sm:$0xf]
        %v748 = vld [vmem:[%s1 + $0x6c] sm:$0xf]
        %v749 = vld [vmem:[%s1 + $0x70] sm:$0xf]
        %v750 = vld [vmem:[%s1 + $0x74] sm:$0xf]
        %v751 = vld [vmem:[%s1 + $0x78] sm:$0xf]
        %v752 = vld [vmem:[%s1 + $0x7c] sm:$0xf]
        %v753 = vld [vmem:[%s1 + $0x80] sm:$0xf]
        %v754 = vld [vmem:[%s1 + $0x84] sm:$0xf]
        %v755 = vld [vmem:[%s1 + $0x88] sm:$0xf]
        %v756 = vld [vmem:[%s1 + $0x8c] sm:$0xf]
        %v757 = vld [vmem:[%s1 + $0x90] sm:$0xf]
        %v758 = vld [vmem:[%s1 + $0x94] sm:$0xf]
        %v759 = vld [vmem:[%s1 + $0x98] sm:$0xf]
        %v760 = vld [vmem:[%s1 + $0x9c] sm:$0xf]
        %v761 = vld [vmem:[%s1 + $0xa0] sm:$0xf]
        %v762 = vld [vmem:[%s1 + $0xa4] sm:$0xf]
        %v763 = vld [vmem:[%s1 + $0xa8] sm:$0xf]
        %v764 = vld [vmem:[%s1 + $0xac] sm:$0xf]
        %v765 = vld [vmem:[%s1 + $0xb0] sm:$0xf]
        %v766 = vld [vmem:[%s1 + $0xb4] sm:$0xf]
        %v767 = vld [vmem:[%s1 + $0xb8] sm:$0xf]
        %v768 = vld [vmem:[%s1 + $0xbc] sm:$0xf]
        %v769 = vld [vmem:[%s1 + $0xc0] sm:$0xf]
        %v770 = vld [vmem:[%s1 + $0xc4] sm:$0xf]
        %v771 = vld [vmem:[%s1 + $0xc8] sm:$0xf]
        %v772 = vld [vmem:[%s1 + $0xcc] sm:$0xf]
        %v773 = vld [vmem:[%s1 + $0xd0] sm:$0xf]
        %v774 = vld [vmem:[%s1 + $0xd4] sm:$0xf]
        %v775 = vld [vmem:[%s1 + $0xd8] sm:$0xf]
        %v776 = vld [vmem:[%s1 + $0xdc] sm:$0xf]
        %v777 = vld [vmem:[%s1 + $0xe0] sm:$0xf]
        %v778 = vld [vmem:[%s1 + $0xe4] sm:$0xf]
        %v779 = vld [vmem:[%s1 + $0xe8] sm:$0xf]
        %v780 = vld [vmem:[%s1 + $0xec] sm:$0xf]
        %v781 = vld [vmem:[%s1 + $0xf0] sm:$0xf]
        %v782 = vld [vmem:[%s1 + $0xf4] sm:$0xf]
        %v783 = vld [vmem:[%s1 + $0xf8] sm:$0xf]
        %v784 = vld [vmem:[%s1 + $0xfc] sm:$0xf]
        %v785 = vld [vmem:[%s1 + $0x100] sm:$0xf]
        %v786 = vld [vmem:[%s1 + $0x104] sm:$0xf]
        %v787 = vld [vmem:[%s1 + $0x108] sm:$0xf]
        %v788 = vld [vmem:[%s1 + $0x10c] sm:$0xf]
        %v789 = vld [vmem:[%s1 + $0x110] sm:$0xf]
        %v790 = vld [vmem:[%s1 + $0x114] sm:$0xf]
        %v791 = vld [vmem:[%s1 + $0x118] sm:$0xf]
        %v792 = vld [vmem:[%s1 + $0x11c] sm:$0xf]
        %v793 = vld [vmem:[%s1 + $0x120] sm:$0xf]
        %v794 = vld [vmem:[%s1 + $0x124] sm:$0xf]
        %v795 = vld [vmem:[%s1 + $0x128] sm:$0xf]
        %v796 = vld [vmem:[%s1 + $0x12c] sm:$0xf]
        %v797 = vld [vmem:[%s1 + $0x130] sm:$0xf]
        %v798 = vld [vmem:[%s1 + $0x134] sm:$0xf]
        %v799 = vld [vmem:[%s1 + $0x138] sm:$0xf]
        %v800 = vld [vmem:[%s1 + $0x13c] sm:$0xf]
        %v801 = vld [vmem:[%s1 + $0x140] sm:$0xf]
        %v802 = vld [vmem:[%s1 + $0x144] sm:$0xf]
        %v803 = vld [vmem:[%s1 + $0x148] sm:$0xf]
        %v804 = vld [vmem:[%s1 + $0x14c] sm:$0xf]
        %v805 = vld [vmem:[%s1 + $0x150] sm:$0xf]
        %v806 = vld [vmem:[%s1 + $0x154] sm:$0xf]
        %v807 = vld [vmem:[%s1 + $0x158] sm:$0xf]
        %v808 = vld [vmem:[%s1 + $0x15c] sm:$0xf]
        %v809 = vld [vmem:[%s1 + $0x160] sm:$0xf]
        %v810 = vld [vmem:[%s1 + $0x164] sm:$0xf]
        %v811 = vld [vmem:[%s1 + $0x168] sm:$0xf]
        %v812 = vld [vmem:[%s1 + $0x16c] sm:$0xf]
        %v813 = vld [vmem:[%s1 + $0x170] sm:$0xf]
        %v814 = vld [vmem:[%s1 + $0x174] sm:$0xf]
        %v815 = vld [vmem:[%s1 + $0x178] sm:$0xf]
        %v816 = vld [vmem:[%s1 + $0x17c] sm:$0xf]
        %v817 = vld [vmem:[%s1 + $0x180] sm:$0xf]
        %v818 = vld [vmem:[%s1 + $0x184] sm:$0xf]
        %v819 = vld [vmem:[%s1 + $0x188] sm:$0xf]
        %v820 = vld [vmem:[%s1 + $0x18c] sm:$0xf]
        %v821 = vld [vmem:[%s1 + $0x190] sm:$0xf]
        %v822 = vld [vmem:[%s1 + $0x194] sm:$0xf]
        %v823 = vld [vmem:[%s1 + $0x198] sm:$0xf]
        %v824 = vld [vmem:[%s1 + $0x19c] sm:$0xf]
        %v825 = vld [vmem:[%s1 + $0x1a0] sm:$0xf]
        %v826 = vld [vmem:[%s1 + $0x1a4] sm:$0xf]
        %v827 = vld [vmem:[%s1 + $0x1a8] sm:$0xf]
        %v828 = vld [vmem:[%s1 + $0x1ac] sm:$0xf]
        %v829 = vld [vmem:[%s1 + $0x1b0] sm:$0xf]
        %v830 = vld [vmem:[%s1 + $0x1b4] sm:$0xf]
        %v831 = vld [vmem:[%s1 + $0x1b8] sm:$0xf]
        %v832 = vld [vmem:[%s1 + $0x1bc] sm:$0xf]
        %v833 = vld [vmem:[%s1 + $0x1c0] sm:$0xf]
        %v834 = vld [vmem:[%s1 + $0x1c4] sm:$0xf]
        %v835 = vld [vmem:[%s1 + $0x1c8] sm:$0xf]
        %v836 = vld [vmem:[%s1 + $0x1cc] sm:$0xf]
        %v837 = vld [vmem:[%s1 + $0x1d0] sm:$0xf]
        %v838 = vld [vmem:[%s1 + $0x1d4] sm:$0xf]
        %v839 = vld [vmem:[%s1 + $0x1d8] sm:$0xf]
        %v840 = vld [vmem:[%s1 + $0x1dc] sm:$0xf]
        %v841 = vld [vmem:[%s1 + $0x1e0] sm:$0xf]
        %v842 = vld [vmem:[%s1 + $0x1e4] sm:$0xf]
        %v843 = vld [vmem:[%s1 + $0x1e8] sm:$0xf]
        %v844 = vld [vmem:[%s1 + $0x1ec] sm:$0xf]
        %v845 = vld [vmem:[%s1 + $0x1f0] sm:$0xf]
        %v846 = vld [vmem:[%s1 + $0x1f4] sm:$0xf]
        %v847 = vld [vmem:[%s1 + $0x1f8] sm:$0xf]
        %v848 = vld [vmem:[%s1 + $0x1fc] sm:$0xf]
        %v849 = vld [vmem:[%s1 + $0x200] sm:$0xf]
        %v850 = vld [vmem:[%s1 + $0x204] sm:$0xf]
        %v851 = vld [vmem:[%s1 + $0x208] sm:$0xf]
        %v852 = vld [vmem:[%s1 + $0x20c] sm:$0xf]
        %v853 = vld [vmem:[%s1 + $0x210] sm:$0xf]
        %v854 = vld [vmem:[%s1 + $0x214] sm:$0xf]
        %v855 = vld [vmem:[%s1 + $0x218] sm:$0xf]
        %v856 = vld [vmem:[%s1 + $0x21c] sm:$0xf]
        %v857 = vld [vmem:[%s1 + $0x220] sm:$0xf]
        %v858 = vld [vmem:[%s1 + $0x224] sm:$0xf]
        %v859 = vld [vmem:[%s1 + $0x228] sm:$0xf]
        %v860 = vld [vmem:[%s1 + $0x22c] sm:$0xf]
        %v861 = vld [vmem:[%s1 + $0x230] sm:$0xf]
        %v862 = vld [vmem:[%s1 + $0x234] sm:$0xf]
        %v863 = vld [vmem:[%s1 + $0x238] sm:$0xf]
        %v864 = vld [vmem:[%s1 + $0x23c] sm:$0xf]
        %v1009 = vunpack.c.l.b16 %v721
        %v1010 = vunpack.c.l.b16 %v722
        %v1011 = vunpack.c.l.b16 %v723
        %v1012 = vunpack.c.l.b16 %v724
        %v1013 = vunpack.c.l.b16 %v725
        %v1014 = vunpack.c.l.b16 %v726
        %v1015 = vunpack.c.l.b16 %v727
        %v1016 = vunpack.c.l.b16 %v728
        %v1017 = vunpack.c.l.b16 %v729
        %v1018 = vunpack.c.l.b16 %v730
        %v1019 = vunpack.c.l.b16 %v731
        %v1020 = vunpack.c.l.b16 %v732
        %v1021 = vunpack.c.l.b16 %v733
        %v1022 = vunpack.c.l.b16 %v734
        %v1023 = vunpack.c.l.b16 %v735
        %v1024 = vunpack.c.l.b16 %v736
        %v1025 = vunpack.c.l.b16 %v737
        %v1026 = vunpack.c.l.b16 %v738
        %v1027 = vunpack.c.l.b16 %v739
        %v1028 = vunpack.c.l.b16 %v740
        %v1029 = vunpack.c.l.b16 %v741
        %v1030 = vunpack.c.l.b16 %v742
        %v1031 = vunpack.c.l.b16 %v743
        %v1032 = vunpack.c.l.b16 %v744
        %v1033 = vunpack.c.l.b16 %v745
        %v1034 = vunpack.c.l.b16 %v746
        %v1035 = vunpack.c.l.b16 %v747
        %v1036 = vunpack.c.l.b16 %v748
        %v1037 = vunpack.c.l.b16 %v749
        %v1038 = vunpack.c.l.b16 %v750
        %v1039 = vunpack.c.l.b16 %v751
        %v1040 = vunpack.c.l.b16 %v752
        %v1041 = vunpack.c.l.b16 %v753
        %v1042 = vunpack.c.l.b16 %v754
        %v1043 = vunpack.c.l.b16 %v755
        %v1044 = vunpack.c.l.b16 %v756
        %v1045 = vunpack.c.l.b16 %v757
        %v1046 = vunpack.c.l.b16 %v758
        %v1047 = vunpack.c.l.b16 %v759
        %v1048 = vunpack.c.l.b16 %v760
        %v1049 = vunpack.c.l.b16 %v761
        %v1050 = vunpack.c.l.b16 %v762
        %v1051 = vunpack.c.l.b16 %v763
        %v1052 = vunpack.c.l.b16 %v764
        %v1053 = vunpack.c.l.b16 %v765
        %v1054 = vunpack.c.l.b16 %v766
        %v1055 = vunpack.c.l.b16 %v767
        %v1056 = vunpack.c.l.b16 %v768
        %v1057 = vunpack.c.l.b16 %v769
        %v1058 = vunpack.c.l.b16 %v770
        %v1059 = vunpack.c.l.b16 %v771
        %v1060 = vunpack.c.l.b16 %v772
        %v1061 = vunpack.c.l.b16 %v773
        %v1062 = vunpack.c.l.b16 %v774
        %v1063 = vunpack.c.l.b16 %v775
        %v1064 = vunpack.c.l.b16 %v776
        %v1065 = vunpack.c.l.b16 %v777
        %v1066 = vunpack.c.l.b16 %v778
        %v1067 = vunpack.c.l.b16 %v779
        %v1068 = vunpack.c.l.b16 %v780
        %v1069 = vunpack.c.l.b16 %v781
        %v1070 = vunpack.c.l.b16 %v782
        %v1071 = vunpack.c.l.b16 %v783
        %v1072 = vunpack.c.l.b16 %v784
        %v1073 = vunpack.c.l.b16 %v785
        %v1074 = vunpack.c.l.b16 %v786
        %v1075 = vunpack.c.l.b16 %v787
        %v1076 = vunpack.c.l.b16 %v788
        %v1077 = vunpack.c.l.b16 %v789
        %v1078 = vunpack.c.l.b16 %v790
        %v1079 = vunpack.c.l.b16 %v791
        %v1080 = vunpack.c.l.b16 %v792
        %v1081 = vunpack.c.l.b16 %v793
        %v1082 = vunpack.c.l.b16 %v794
        %v1083 = vunpack.c.l.b16 %v795
        %v1084 = vunpack.c.l.b16 %v796
        %v1085 = vunpack.c.l.b16 %v797
        %v1086 = vunpack.c.l.b16 %v798
        %v1087 = vunpack.c.l.b16 %v799
        %v1088 = vunpack.c.l.b16 %v800
        %v1089 = vunpack.c.l.b16 %v801
        %v1090 = vunpack.c.l.b16 %v802
        %v1091 = vunpack.c.l.b16 %v803
        %v1092 = vunpack.c.l.b16 %v804
        %v1093 = vunpack.c.l.b16 %v805
        %v1094 = vunpack.c.l.b16 %v806
        %v1095 = vunpack.c.l.b16 %v807
        %v1096 = vunpack.c.l.b16 %v808
        %v1097 = vunpack.c.l.b16 %v809
        %v1098 = vunpack.c.l.b16 %v810
        %v1099 = vunpack.c.l.b16 %v811
        %v1100 = vunpack.c.l.b16 %v812
        %v1101 = vunpack.c.l.b16 %v813
        %v1102 = vunpack.c.l.b16 %v814
        %v1103 = vunpack.c.l.b16 %v815
        %v1104 = vunpack.c.l.b16 %v816
        %v1105 = vunpack.c.l.b16 %v817
        %v1106 = vunpack.c.l.b16 %v818
        %v1107 = vunpack.c.l.b16 %v819
        %v1108 = vunpack.c.l.b16 %v820
        %v1109 = vunpack.c.l.b16 %v821
        %v1110 = vunpack.c.l.b16 %v822
        %v1111 = vunpack.c.l.b16 %v823
        %v1112 = vunpack.c.l.b16 %v824
        %v1113 = vunpack.c.l.b16 %v825
        %v1114 = vunpack.c.l.b16 %v826
        %v1115 = vunpack.c.l.b16 %v827
        %v1116 = vunpack.c.l.b16 %v828
        %v1117 = vunpack.c.l.b16 %v829
        %v1118 = vunpack.c.l.b16 %v830
        %v1119 = vunpack.c.l.b16 %v831
        %v1120 = vunpack.c.l.b16 %v832
        %v1121 = vunpack.c.l.b16 %v833
        %v1122 = vunpack.c.l.b16 %v834
        %v1123 = vunpack.c.l.b16 %v835
        %v1124 = vunpack.c.l.b16 %v836
        %v1125 = vunpack.c.l.b16 %v837
        %v1126 = vunpack.c.l.b16 %v838
        %v1127 = vunpack.c.l.b16 %v839
        %v1128 = vunpack.c.l.b16 %v840
        %v1129 = vunpack.c.l.b16 %v841
        %v1130 = vunpack.c.l.b16 %v842
        %v1131 = vunpack.c.l.b16 %v843
        %v1132 = vunpack.c.l.b16 %v844
        %v1133 = vunpack.c.l.b16 %v845
        %v1134 = vunpack.c.l.b16 %v846
        %v1135 = vunpack.c.l.b16 %v847
        %v1136 = vunpack.c.l.b16 %v848
        %v1137 = vunpack.c.l.b16 %v849
        %v1138 = vunpack.c.l.b16 %v850
        %v1139 = vunpack.c.l.b16 %v851
        %v1140 = vunpack.c.l.b16 %v852
        %v1141 = vunpack.c.l.b16 %v853
        %v1142 = vunpack.c.l.b16 %v854
        %v1143 = vunpack.c.l.b16 %v855
        %v1144 = vunpack.c.l.b16 %v856
        %v1145 = vunpack.c.l.b16 %v857
        %v1146 = vunpack.c.l.b16 %v858
        %v1147 = vunpack.c.l.b16 %v859
        %v1148 = vunpack.c.l.b16 %v860
        %v1149 = vunpack.c.l.b16 %v861
        %v1150 = vunpack.c.l.b16 %v862
        %v1151 = vunpack.c.l.b16 %v863
        %v1152 = vunpack.c.l.b16 %v864
        %v1153 = vpack.c.b16 %v1010, %v1009
        %v1154 = vpack.c.b16 %v1012, %v1011
        %v1155 = vpack.c.b16 %v1014, %v1013
        %v1156 = vpack.c.b16 %v1016, %v1015
        %v1157 = vpack.c.b16 %v1018, %v1017
        %v1158 = vpack.c.b16 %v1020, %v1019
        %v1159 = vpack.c.b16 %v1022, %v1021
        %v1160 = vpack.c.b16 %v1024, %v1023
        %v1161 = vpack.c.b16 %v1026, %v1025
        %v1162 = vpack.c.b16 %v1028, %v1027
        %v1163 = vpack.c.b16 %v1030, %v1029
        %v1164 = vpack.c.b16 %v1032, %v1031
        %v1165 = vpack.c.b16 %v1034, %v1033
        %v1166 = vpack.c.b16 %v1036, %v1035
        %v1167 = vpack.c.b16 %v1038, %v1037
        %v1168 = vpack.c.b16 %v1040, %v1039
        %v1169 = vpack.c.b16 %v1042, %v1041
        %v1170 = vpack.c.b16 %v1044, %v1043
        %v1171 = vpack.c.b16 %v1046, %v1045
        %v1172 = vpack.c.b16 %v1048, %v1047
        %v1173 = vpack.c.b16 %v1050, %v1049
        %v1174 = vpack.c.b16 %v1052, %v1051
        %v1175 = vpack.c.b16 %v1054, %v1053
        %v1176 = vpack.c.b16 %v1056, %v1055
        %v1177 = vpack.c.b16 %v1058, %v1057
        %v1178 = vpack.c.b16 %v1060, %v1059
        %v1179 = vpack.c.b16 %v1062, %v1061
        %v1180 = vpack.c.b16 %v1064, %v1063
        %v1181 = vpack.c.b16 %v1066, %v1065
        %v1182 = vpack.c.b16 %v1068, %v1067
        %v1183 = vpack.c.b16 %v1070, %v1069
        %v1184 = vpack.c.b16 %v1072, %v1071
        %v1185 = vpack.c.b16 %v1074, %v1073
        %v1186 = vpack.c.b16 %v1076, %v1075
        %v1187 = vpack.c.b16 %v1078, %v1077
        %v1188 = vpack.c.b16 %v1080, %v1079
        %v1189 = vpack.c.b16 %v1082, %v1081
        %v1190 = vpack.c.b16 %v1084, %v1083
        %v1191 = vpack.c.b16 %v1086, %v1085
        %v1192 = vpack.c.b16 %v1088, %v1087
        %v1193 = vpack.c.b16 %v1090, %v1089
        %v1194 = vpack.c.b16 %v1092, %v1091
        %v1195 = vpack.c.b16 %v1094, %v1093
        %v1196 = vpack.c.b16 %v1096, %v1095
        %v1197 = vpack.c.b16 %v1098, %v1097
        %v1198 = vpack.c.b16 %v1100, %v1099
        %v1199 = vpack.c.b16 %v1102, %v1101
        %v1200 = vpack.c.b16 %v1104, %v1103
        %v1201 = vpack.c.b16 %v1106, %v1105
        %v1202 = vpack.c.b16 %v1108, %v1107
        %v1203 = vpack.c.b16 %v1110, %v1109
        %v1204 = vpack.c.b16 %v1112, %v1111
        %v1205 = vpack.c.b16 %v1114, %v1113
        %v1206 = vpack.c.b16 %v1116, %v1115
        %v1207 = vpack.c.b16 %v1118, %v1117
        %v1208 = vpack.c.b16 %v1120, %v1119
        %v1209 = vpack.c.b16 %v1122, %v1121
        %v1210 = vpack.c.b16 %v1124, %v1123
        %v1211 = vpack.c.b16 %v1126, %v1125
        %v1212 = vpack.c.b16 %v1128, %v1127
        %v1213 = vpack.c.b16 %v1130, %v1129
        %v1214 = vpack.c.b16 %v1132, %v1131
        %v1215 = vpack.c.b16 %v1134, %v1133
        %v1216 = vpack.c.b16 %v1136, %v1135
        %v1217 = vpack.c.b16 %v1138, %v1137
        %v1218 = vpack.c.b16 %v1140, %v1139
        %v1219 = vpack.c.b16 %v1142, %v1141
        %v1220 = vpack.c.b16 %v1144, %v1143
        %v1221 = vpack.c.b16 %v1146, %v1145
        %v1222 = vpack.c.b16 %v1148, %v1147
        %v1223 = vpack.c.b16 %v1150, %v1149
        %v1224 = vpack.c.b16 %v1152, %v1151
        %1297 = vmatprep.subr.bf16.mxu0 0
        %1298 = vmatpush1.bf16.msra.mxu0 %v1160
        %1299 = vmatprep.subr.bf16.mxu0 0
        %1300 = vmatpush1.bf16.msra.mxu0 %v1159
        %1301 = vmatprep.subr.bf16.mxu0 0
        %1302 = vmatpush1.bf16.msra.mxu0 %v1158
        %1303 = vmatprep.subr.bf16.mxu0 0
        %1304 = vmatpush1.bf16.msra.mxu0 %v1157
        %1305 = vmatprep.subr.bf16.mxu0 0
        %1306 = vmatpush1.bf16.msra.mxu0 %v1156
        %1307 = vmatprep.subr.bf16.mxu0 0
        %1308 = vmatpush1.bf16.msra.mxu0 %v1155
        %1309 = vmatprep.subr.bf16.mxu0 0
        %1310 = vmatpush1.bf16.msra.mxu0 %v1154
        %1311 = vmatprep.subr.bf16.mxu0 0
        %1312 = vmatpush1.bf16.msra.mxu0 %v1153
        %1313 = vmatprep.subr.bf16.mxu0 0
        %1314 = vmatpush2.bf16.msra.mxu0 %v1168
        %1315 = vmatprep.subr.bf16.mxu0 0
        %1316 = vmatpush2.bf16.msra.mxu0 %v1167
        %1317 = vmatprep.subr.bf16.mxu0 0
        %1318 = vmatpush2.bf16.msra.mxu0 %v1166
        %1319 = vmatprep.subr.bf16.mxu0 0
        %1320 = vmatpush2.bf16.msra.mxu0 %v1165
        %1321 = vmatprep.subr.bf16.mxu0 0
        %1322 = vmatpush2.bf16.msra.mxu0 %v1164
        %1323 = vmatprep.subr.bf16.mxu0 0
        %1324 = vmatpush2.bf16.msra.mxu0 %v1163
        %1325 = vmatprep.subr.bf16.mxu0 0
        %1326 = vmatpush2.bf16.msra.mxu0 %v1162
        %1327 = vmatprep.subr.bf16.mxu0 0
        %1328 = vmatpush2.bf16.msra.mxu0 %v1161
        %1329 = vmatprep.mubr.bf16.mxu0 %v407
        %1330 = vmatmul.mubr.bf16.gmra.mxu0 %v315
        %v1331 = vpop.f32.mrf.mxu0
        %v1332 = vadd.f32 0.0, %v1331
        %v1333 = vpop.f32.mrf.mxu0
        %v1334 = vpop.f32.mrf.mxu0
        %v1335 = vadd.f32 0.0, %v1334
        %v1336 = vpop.f32.mrf.mxu0
        %1337 = vmatprep.mubr.bf16.mxu0 %v419
        %1338 = vmatmul.mubr.bf16.gmra.mxu0 %v316
        %v1339 = vpop.f32.mrf.mxu0
        %v1340 = vadd.f32 0.0, %v1339
        %v1341 = vpop.f32.mrf.mxu0
        %v1342 = vpop.f32.mrf.mxu0
        %v1343 = vadd.f32 0.0, %v1342
        %v1344 = vpop.f32.mrf.mxu0
        %1345 = vmatprep.mubr.bf16.mxu0 %v431
        %1346 = vmatmul.mubr.bf16.gmra.mxu0 %v317
        %v1347 = vpop.f32.mrf.mxu0
        %v1348 = vadd.f32 0.0, %v1347
        %v1349 = vpop.f32.mrf.mxu0
        %v1350 = vpop.f32.mrf.mxu0
        %v1351 = vadd.f32 0.0, %v1350
        %v1352 = vpop.f32.mrf.mxu0
        %1353 = vmatprep.mubr.bf16.mxu0 %v443
        %1354 = vmatmul.mubr.bf16.gmra.mxu0 %v318
        %v1355 = vpop.f32.mrf.mxu0
        %v1356 = vadd.f32 0.0, %v1355
        %v1357 = vpop.f32.mrf.mxu0
        %v1358 = vpop.f32.mrf.mxu0
        %v1359 = vadd.f32 0.0, %v1358
        %v1360 = vpop.f32.mrf.mxu0
        %1361 = vmatprep.mubr.bf16.mxu0 %v455
        %1362 = vmatmul.mubr.bf16.gmra.mxu0 %v319
        %v1363 = vpop.f32.mrf.mxu0
        %v1364 = vadd.f32 0.0, %v1363
        %v1365 = vpop.f32.mrf.mxu0
        %v1366 = vpop.f32.mrf.mxu0
        %v1367 = vadd.f32 0.0, %v1366
        %v1368 = vpop.f32.mrf.mxu0
        %1369 = vmatprep.mubr.bf16.mxu0 %v467
        %1370 = vmatmul.mubr.bf16.gmra.mxu0 %v320
        %v1371 = vpop.f32.mrf.mxu0
        %v1372 = vadd.f32 0.0, %v1371
        %v1373 = vpop.f32.mrf.mxu0
        %v1374 = vpop.f32.mrf.mxu0
        %v1375 = vadd.f32 0.0, %v1374
        %v1376 = vpop.f32.mrf.mxu0
        %1377 = vmatprep.mubr.bf16.mxu0 %v479
        %1378 = vmatmul.mubr.bf16.gmra.mxu0 %v321
        %v1379 = vpop.f32.mrf.mxu0
        %v1380 = vadd.f32 0.0, %v1379
        %v1381 = vpop.f32.mrf.mxu0
        %v1382 = vpop.f32.mrf.mxu0
        %v1383 = vadd.f32 0.0, %v1382
        %v1384 = vpop.f32.mrf.mxu0
        %1385 = vmatprep.mubr.bf16.mxu0 %v491
        %1386 = vmatmul.mubr.bf16.gmra.mxu0 %v322
        %v1387 = vpop.f32.mrf.mxu0
        %v1388 = vadd.f32 0.0, %v1387
        %v1389 = vpop.f32.mrf.mxu0
        %v1390 = vpop.f32.mrf.mxu0
        %v1391 = vadd.f32 0.0, %v1390
        %v1392 = vpop.f32.mrf.mxu0
        %1393 = vmatprep.mubr.bf16.mxu0 %v503
        %1394 = vmatmul.mubr.bf16.gmra.mxu0 %v323
        %v1395 = vpop.f32.mrf.mxu0
        %v1396 = vadd.f32 0.0, %v1395
        %v1397 = vpop.f32.mrf.mxu0
        %v1398 = vpop.f32.mrf.mxu0
        %v1399 = vadd.f32 0.0, %v1398
        %v1400 = vpop.f32.mrf.mxu0
        %1401 = vmatprep.mubr.bf16.mxu0 %v515
        %1402 = vmatmul.mubr.bf16.gmra.mxu0 %v324
        %v1403 = vpop.f32.mrf.mxu0
        %v1404 = vadd.f32 0.0, %v1403
        %v1405 = vpop.f32.mrf.mxu0
        %v1406 = vpop.f32.mrf.mxu0
        %v1407 = vadd.f32 0.0, %v1406
        %v1408 = vpop.f32.mrf.mxu0
        %1409 = vmatprep.mubr.bf16.mxu0 %v527
        %1410 = vmatmul.mubr.bf16.gmra.mxu0 %v325
        %v1411 = vpop.f32.mrf.mxu0
        %v1412 = vadd.f32 0.0, %v1411
        %v1413 = vpop.f32.mrf.mxu0
        %v1414 = vpop.f32.mrf.mxu0
        %v1415 = vadd.f32 0.0, %v1414
        %v1416 = vpop.f32.mrf.mxu0
        %1417 = vmatprep.mubr.bf16.mxu0 %v539
        %1418 = vmatmul.mubr.bf16.gmra.mxu0 %v326
        %v1419 = vpop.f32.mrf.mxu0
        %v1420 = vadd.f32 0.0, %v1419
        %v1421 = vpop.f32.mrf.mxu0
        %v1422 = vpop.f32.mrf.mxu0
        %v1423 = vadd.f32 0.0, %v1422
        %v1424 = vpop.f32.mrf.mxu0
        %1425 = vmatprep.mubr.bf16.mxu0 %v551
        %1426 = vmatmul.mubr.bf16.gmra.mxu0 %v327
        %v1427 = vpop.f32.mrf.mxu0
        %v1428 = vadd.f32 0.0, %v1427
        %v1429 = vpop.f32.mrf.mxu0
        %v1430 = vpop.f32.mrf.mxu0
        %v1431 = vadd.f32 0.0, %v1430
        %v1432 = vpop.f32.mrf.mxu0
        %1433 = vmatprep.mubr.bf16.mxu0 %v563
        %1434 = vmatmul.mubr.bf16.gmra.mxu0 %v328
        %v1435 = vpop.f32.mrf.mxu0
        %v1436 = vadd.f32 0.0, %v1435
        %v1437 = vpop.f32.mrf.mxu0
        %v1438 = vpop.f32.mrf.mxu0
        %v1439 = vadd.f32 0.0, %v1438
        %v1440 = vpop.f32.mrf.mxu0
        %1441 = vmatprep.mubr.bf16.mxu0 %v575
        %1442 = vmatmul.mubr.bf16.gmra.mxu0 %v329
        %v1443 = vpop.f32.mrf.mxu0
        %v1444 = vadd.f32 0.0, %v1443
        %v1445 = vpop.f32.mrf.mxu0
        %v1446 = vpop.f32.mrf.mxu0
        %v1447 = vadd.f32 0.0, %v1446
        %v1448 = vpop.f32.mrf.mxu0
        %1449 = vmatprep.mubr.bf16.mxu0 %v587
        %1450 = vmatmul.mubr.bf16.gmra.mxu0 %v330
        %v1451 = vpop.f32.mrf.mxu0
        %v1452 = vadd.f32 0.0, %v1451
        %v1453 = vpop.f32.mrf.mxu0
        %v1454 = vpop.f32.mrf.mxu0
        %v1455 = vadd.f32 0.0, %v1454
        %v1456 = vpop.f32.mrf.mxu0
        %1457 = vdwg.mxu0
        %1458 = vmatprep.subr.bf16.mxu0 0
        %1459 = vmatpush1.bf16.msra.mxu0 %v1176
        %1460 = vmatprep.subr.bf16.mxu0 0
        %1461 = vmatpush1.bf16.msra.mxu0 %v1175
        %1462 = vmatprep.subr.bf16.mxu0 0
        %1463 = vmatpush1.bf16.msra.mxu0 %v1174
        %1464 = vmatprep.subr.bf16.mxu0 0
        %1465 = vmatpush1.bf16.msra.mxu0 %v1173
        %1466 = vmatprep.subr.bf16.mxu0 0
        %1467 = vmatpush1.bf16.msra.mxu0 %v1172
        %1468 = vmatprep.subr.bf16.mxu0 0
        %1469 = vmatpush1.bf16.msra.mxu0 %v1171
        %1470 = vmatprep.subr.bf16.mxu0 0
        %1471 = vmatpush1.bf16.msra.mxu0 %v1170
        %1472 = vmatprep.subr.bf16.mxu0 0
        %1473 = vmatpush1.bf16.msra.mxu0 %v1169
        %1474 = vmatprep.subr.bf16.mxu0 0
        %1475 = vmatpush2.bf16.msra.mxu0 %v1184
        %1476 = vmatprep.subr.bf16.mxu0 0
        %1477 = vmatpush2.bf16.msra.mxu0 %v1183
        %1478 = vmatprep.subr.bf16.mxu0 0
        %1479 = vmatpush2.bf16.msra.mxu0 %v1182
        %1480 = vmatprep.subr.bf16.mxu0 0
        %1481 = vmatpush2.bf16.msra.mxu0 %v1181
        %1482 = vmatprep.subr.bf16.mxu0 0
        %1483 = vmatpush2.bf16.msra.mxu0 %v1180
        %1484 = vmatprep.subr.bf16.mxu0 0
        %1485 = vmatpush2.bf16.msra.mxu0 %v1179
        %1486 = vmatprep.subr.bf16.mxu0 0
        %1487 = vmatpush2.bf16.msra.mxu0 %v1178
        %1488 = vmatprep.subr.bf16.mxu0 0
        %1489 = vmatpush2.bf16.msra.mxu0 %v1177
        %1490 = vmatprep.mubr.bf16.mxu0 %v316
        %1491 = vmatmul.mubr.bf16.gmra.mxu0 %v607
        %v1492 = vpop.f32.mrf.mxu0
        %v1493 = vadd.f32 %v1332, %v1492
        %v1494 = vpop.f32.mrf.mxu0
        %v1495 = vpop.f32.mrf.mxu0
        %v1496 = vadd.f32 %v1335, %v1495
        %v1497 = vpop.f32.mrf.mxu0
        %1498 = vmatprep.mubr.bf16.mxu0 %v317
        %1499 = vmatmul.mubr.bf16.gmra.mxu0 %v610
        %v1500 = vpop.f32.mrf.mxu0
        %v1501 = vadd.f32 %v1340, %v1500
        %v1502 = vpop.f32.mrf.mxu0
        %v1503 = vpop.f32.mrf.mxu0
        %v1504 = vadd.f32 %v1343, %v1503
        %v1505 = vpop.f32.mrf.mxu0
        %1506 = vmatprep.mubr.bf16.mxu0 %v318
        %1507 = vmatmul.mubr.bf16.gmra.mxu0 %v613
        %v1508 = vpop.f32.mrf.mxu0
        %v1509 = vadd.f32 %v1348, %v1508
        %v1510 = vpop.f32.mrf.mxu0
        %v1511 = vpop.f32.mrf.mxu0
        %v1512 = vadd.f32 %v1351, %v1511
        %v1513 = vpop.f32.mrf.mxu0
        %1514 = vmatprep.mubr.bf16.mxu0 %v319
        %1515 = vmatmul.mubr.bf16.gmra.mxu0 %v616
        %v1516 = vpop.f32.mrf.mxu0
        %v1517 = vadd.f32 %v1356, %v1516
        %v1518 = vpop.f32.mrf.mxu0
        %v1519 = vpop.f32.mrf.mxu0
        %v1520 = vadd.f32 %v1359, %v1519
        %v1521 = vpop.f32.mrf.mxu0
        %1522 = vmatprep.mubr.bf16.mxu0 %v320
        %1523 = vmatmul.mubr.bf16.gmra.mxu0 %v619
        %v1524 = vpop.f32.mrf.mxu0
        %v1525 = vadd.f32 %v1364, %v1524
        %v1526 = vpop.f32.mrf.mxu0
        %v1527 = vpop.f32.mrf.mxu0
        %v1528 = vadd.f32 %v1367, %v1527
        %v1529 = vpop.f32.mrf.mxu0
        %1530 = vmatprep.mubr.bf16.mxu0 %v321
        %1531 = vmatmul.mubr.bf16.gmra.mxu0 %v622
        %v1532 = vpop.f32.mrf.mxu0
        %v1533 = vadd.f32 %v1372, %v1532
        %v1534 = vpop.f32.mrf.mxu0
        %v1535 = vpop.f32.mrf.mxu0
        %v1536 = vadd.f32 %v1375, %v1535
        %v1537 = vpop.f32.mrf.mxu0
        %1538 = vmatprep.mubr.bf16.mxu0 %v322
        %1539 = vmatmul.mubr.bf16.gmra.mxu0 %v625
        %v1540 = vpop.f32.mrf.mxu0
        %v1541 = vadd.f32 %v1380, %v1540
        %v1542 = vpop.f32.mrf.mxu0
        %v1543 = vpop.f32.mrf.mxu0
        %v1544 = vadd.f32 %v1383, %v1543
        %v1545 = vpop.f32.mrf.mxu0
        %1546 = vmatprep.mubr.bf16.mxu0 %v323
        %1547 = vmatmul.mubr.bf16.gmra.mxu0 %v628
        %v1548 = vpop.f32.mrf.mxu0
        %v1549 = vadd.f32 %v1388, %v1548
        %v1550 = vpop.f32.mrf.mxu0
        %v1551 = vpop.f32.mrf.mxu0
        %v1552 = vadd.f32 %v1391, %v1551
        %v1553 = vpop.f32.mrf.mxu0
        %1554 = vmatprep.mubr.bf16.mxu0 %v324
        %1555 = vmatmul.mubr.bf16.gmra.mxu0 %v631
        %v1556 = vpop.f32.mrf.mxu0
        %v1557 = vadd.f32 %v1396, %v1556
        %v1558 = vpop.f32.mrf.mxu0
        %v1559 = vpop.f32.mrf.mxu0
        %v1560 = vadd.f32 %v1399, %v1559
        %v1561 = vpop.f32.mrf.mxu0
        %1562 = vmatprep.mubr.bf16.mxu0 %v325
        %1563 = vmatmul.mubr.bf16.gmra.mxu0 %v634
        %v1564 = vpop.f32.mrf.mxu0
        %v1565 = vadd.f32 %v1404, %v1564
        %v1566 = vpop.f32.mrf.mxu0
        %v1567 = vpop.f32.mrf.mxu0
        %v1568 = vadd.f32 %v1407, %v1567
        %v1569 = vpop.f32.mrf.mxu0
        %1570 = vmatprep.mubr.bf16.mxu0 %v326
        %1571 = vmatmul.mubr.bf16.gmra.mxu0 %v637
        %v1572 = vpop.f32.mrf.mxu0
        %v1573 = vadd.f32 %v1412, %v1572
        %v1574 = vpop.f32.mrf.mxu0
        %v1575 = vpop.f32.mrf.mxu0
        %v1576 = vadd.f32 %v1415, %v1575
        %v1577 = vpop.f32.mrf.mxu0
        %1578 = vmatprep.mubr.bf16.mxu0 %v327
        %1579 = vmatmul.mubr.bf16.gmra.mxu0 %v640
        %v1580 = vpop.f32.mrf.mxu0
        %v1581 = vadd.f32 %v1420, %v1580
        %v1582 = vpop.f32.mrf.mxu0
        %v1583 = vpop.f32.mrf.mxu0
        %v1584 = vadd.f32 %v1423, %v1583
        %v1585 = vpop.f32.mrf.mxu0
        %1586 = vmatprep.mubr.bf16.mxu0 %v328
        %1587 = vmatmul.mubr.bf16.gmra.mxu0 %v643
        %v1588 = vpop.f32.mrf.mxu0
        %v1589 = vadd.f32 %v1428, %v1588
        %v1590 = vpop.f32.mrf.mxu0
        %v1591 = vpop.f32.mrf.mxu0
        %v1592 = vadd.f32 %v1431, %v1591
        %v1593 = vpop.f32.mrf.mxu0
        %1594 = vmatprep.mubr.bf16.mxu0 %v329
        %1595 = vmatmul.mubr.bf16.gmra.mxu0 %v646
        %v1596 = vpop.f32.mrf.mxu0
        %v1597 = vadd.f32 %v1436, %v1596
        %v1598 = vpop.f32.mrf.mxu0
        %v1599 = vpop.f32.mrf.mxu0
        %v1600 = vadd.f32 %v1439, %v1599
        %v1601 = vpop.f32.mrf.mxu0
        %1602 = vmatprep.mubr.bf16.mxu0 %v330
        %1603 = vmatmul.mubr.bf16.gmra.mxu0 %v649
        %v1604 = vpop.f32.mrf.mxu0
        %v1605 = vadd.f32 %v1444, %v1604
        %v1606 = vpop.f32.mrf.mxu0
        %v1607 = vpop.f32.mrf.mxu0
        %v1608 = vadd.f32 %v1447, %v1607
        %v1609 = vpop.f32.mrf.mxu0
        %1610 = vmatprep.mubr.bf16.mxu0 %v673
        %1611 = vmatmul.mubr.bf16.gmra.mxu0 %v652
        %v1612 = vpop.f32.mrf.mxu0
        %v1613 = vadd.f32 %v1452, %v1612
        %v1614 = vpop.f32.mrf.mxu0
        %v1615 = vpop.f32.mrf.mxu0
        %v1616 = vadd.f32 %v1455, %v1615
        %v1617 = vpop.f32.mrf.mxu0
        %1618 = vdwg.mxu0
        %1619 = vmatprep.subr.bf16.mxu0 0
        %1620 = vmatpush1.bf16.msra.mxu0 %v1192
        %1621 = vmatprep.subr.bf16.mxu0 0
        %1622 = vmatpush1.bf16.msra.mxu0 %v1191
        %1623 = vmatprep.subr.bf16.mxu0 0
        %1624 = vmatpush1.bf16.msra.mxu0 %v1190
        %1625 = vmatprep.subr.bf16.mxu0 0
        %1626 = vmatpush1.bf16.msra.mxu0 %v1189
        %1627 = vmatprep.subr.bf16.mxu0 0
        %1628 = vmatpush1.bf16.msra.mxu0 %v1188
        %1629 = vmatprep.subr.bf16.mxu0 0
        %1630 = vmatpush1.bf16.msra.mxu0 %v1187
        %1631 = vmatprep.subr.bf16.mxu0 0
        %1632 = vmatpush1.bf16.msra.mxu0 %v1186
        %1633 = vmatprep.subr.bf16.mxu0 0
        %1634 = vmatpush1.bf16.msra.mxu0 %v1185
        %1635 = vmatprep.subr.bf16.mxu0 0
        %1636 = vmatpush2.bf16.msra.mxu0 %v1200
        %1637 = vmatprep.subr.bf16.mxu0 0
        %1638 = vmatpush2.bf16.msra.mxu0 %v1199
        %1639 = vmatprep.subr.bf16.mxu0 0
        %1640 = vmatpush2.bf16.msra.mxu0 %v1198
        %1641 = vmatprep.subr.bf16.mxu0 0
        %1642 = vmatpush2.bf16.msra.mxu0 %v1197
        %1643 = vmatprep.subr.bf16.mxu0 0
        %1644 = vmatpush2.bf16.msra.mxu0 %v1196
        %1645 = vmatprep.subr.bf16.mxu0 0
        %1646 = vmatpush2.bf16.msra.mxu0 %v1195
        %1647 = vmatprep.subr.bf16.mxu0 0
        %1648 = vmatpush2.bf16.msra.mxu0 %v1194
        %1649 = vmatprep.subr.bf16.mxu0 0
        %1650 = vmatpush2.bf16.msra.mxu0 %v1193
        %1651 = vmatprep.mubr.bf16.mxu0 %v610
        %1652 = vmatmul.mubr.bf16.gmra.mxu0 %v419
        %v1653 = vpop.f32.mrf.mxu0
        %v1654 = vadd.f32 %v1493, %v1653
        %v1655 = vpop.f32.mrf.mxu0
        %v1656 = vpop.f32.mrf.mxu0
        %v1657 = vadd.f32 %v1496, %v1656
        %v1658 = vpop.f32.mrf.mxu0
        %1659 = vmatprep.mubr.bf16.mxu0 %v613
        %1660 = vmatmul.mubr.bf16.gmra.mxu0 %v431
        %v1661 = vpop.f32.mrf.mxu0
        %v1662 = vadd.f32 %v1501, %v1661
        %v1663 = vpop.f32.mrf.mxu0
        %v1664 = vpop.f32.mrf.mxu0
        %v1665 = vadd.f32 %v1504, %v1664
        %v1666 = vpop.f32.mrf.mxu0
        %1667 = vmatprep.mubr.bf16.mxu0 %v616
        %1668 = vmatmul.mubr.bf16.gmra.mxu0 %v443
        %v1669 = vpop.f32.mrf.mxu0
        %v1670 = vadd.f32 %v1509, %v1669
        %v1671 = vpop.f32.mrf.mxu0
        %v1672 = vpop.f32.mrf.mxu0
        %v1673 = vadd.f32 %v1512, %v1672
        %v1674 = vpop.f32.mrf.mxu0
        %1675 = vmatprep.mubr.bf16.mxu0 %v619
        %1676 = vmatmul.mubr.bf16.gmra.mxu0 %v455
        %v1677 = vpop.f32.mrf.mxu0
        %v1678 = vadd.f32 %v1517, %v1677
        %v1679 = vpop.f32.mrf.mxu0
        %v1680 = vpop.f32.mrf.mxu0
        %v1681 = vadd.f32 %v1520, %v1680
        %v1682 = vpop.f32.mrf.mxu0
        %1683 = vmatprep.mubr.bf16.mxu0 %v622
        %1684 = vmatmul.mubr.bf16.gmra.mxu0 %v467
        %v1685 = vpop.f32.mrf.mxu0
        %v1686 = vadd.f32 %v1525, %v1685
        %v1687 = vpop.f32.mrf.mxu0
        %v1688 = vpop.f32.mrf.mxu0
        %v1689 = vadd.f32 %v1528, %v1688
        %v1690 = vpop.f32.mrf.mxu0
        %1691 = vmatprep.mubr.bf16.mxu0 %v625
        %1692 = vmatmul.mubr.bf16.gmra.mxu0 %v479
        %v1693 = vpop.f32.mrf.mxu0
        %v1694 = vadd.f32 %v1533, %v1693
        %v1695 = vpop.f32.mrf.mxu0
        %v1696 = vpop.f32.mrf.mxu0
        %v1697 = vadd.f32 %v1536, %v1696
        %v1698 = vpop.f32.mrf.mxu0
        %1699 = vmatprep.mubr.bf16.mxu0 %v628
        %1700 = vmatmul.mubr.bf16.gmra.mxu0 %v491
        %v1701 = vpop.f32.mrf.mxu0
        %v1702 = vadd.f32 %v1541, %v1701
        %v1703 = vpop.f32.mrf.mxu0
        %v1704 = vpop.f32.mrf.mxu0
        %v1705 = vadd.f32 %v1544, %v1704
        %v1706 = vpop.f32.mrf.mxu0
        %1707 = vmatprep.mubr.bf16.mxu0 %v631
        %1708 = vmatmul.mubr.bf16.gmra.mxu0 %v503
        %v1709 = vpop.f32.mrf.mxu0
        %v1710 = vadd.f32 %v1549, %v1709
        %v1711 = vpop.f32.mrf.mxu0
        %v1712 = vpop.f32.mrf.mxu0
        %v1713 = vadd.f32 %v1552, %v1712
        %v1714 = vpop.f32.mrf.mxu0
        %1715 = vmatprep.mubr.bf16.mxu0 %v634
        %1716 = vmatmul.mubr.bf16.gmra.mxu0 %v515
        %v1717 = vpop.f32.mrf.mxu0
        %v1718 = vadd.f32 %v1557, %v1717
        %v1719 = vpop.f32.mrf.mxu0
        %v1720 = vpop.f32.mrf.mxu0
        %v1721 = vadd.f32 %v1560, %v1720
        %v1722 = vpop.f32.mrf.mxu0
        %1723 = vmatprep.mubr.bf16.mxu0 %v637
        %1724 = vmatmul.mubr.bf16.gmra.mxu0 %v527
        %v1725 = vpop.f32.mrf.mxu0
        %v1726 = vadd.f32 %v1565, %v1725
        %v1727 = vpop.f32.mrf.mxu0
        %v1728 = vpop.f32.mrf.mxu0
        %v1729 = vadd.f32 %v1568, %v1728
        %v1730 = vpop.f32.mrf.mxu0
        %1731 = vmatprep.mubr.bf16.mxu0 %v640
        %1732 = vmatmul.mubr.bf16.gmra.mxu0 %v539
        %v1733 = vpop.f32.mrf.mxu0
        %v1734 = vadd.f32 %v1573, %v1733
        %v1735 = vpop.f32.mrf.mxu0
        %v1736 = vpop.f32.mrf.mxu0
        %v1737 = vadd.f32 %v1576, %v1736
        %v1738 = vpop.f32.mrf.mxu0
        %1739 = vmatprep.mubr.bf16.mxu0 %v643
        %1740 = vmatmul.mubr.bf16.gmra.mxu0 %v551
        %v1741 = vpop.f32.mrf.mxu0
        %v1742 = vadd.f32 %v1581, %v1741
        %v1743 = vpop.f32.mrf.mxu0
        %v1744 = vpop.f32.mrf.mxu0
        %v1745 = vadd.f32 %v1584, %v1744
        %v1746 = vpop.f32.mrf.mxu0
        %1747 = vmatprep.mubr.bf16.mxu0 %v646
        %1748 = vmatmul.mubr.bf16.gmra.mxu0 %v563
        %v1749 = vpop.f32.mrf.mxu0
        %v1750 = vadd.f32 %v1589, %v1749
        %v1751 = vpop.f32.mrf.mxu0
        %v1752 = vpop.f32.mrf.mxu0
        %v1753 = vadd.f32 %v1592, %v1752
        %v1754 = vpop.f32.mrf.mxu0
        %1755 = vmatprep.mubr.bf16.mxu0 %v649
        %1756 = vmatmul.mubr.bf16.gmra.mxu0 %v575
        %v1757 = vpop.f32.mrf.mxu0
        %v1758 = vadd.f32 %v1597, %v1757
        %v1759 = vpop.f32.mrf.mxu0
        %v1760 = vpop.f32.mrf.mxu0
        %v1761 = vadd.f32 %v1600, %v1760
        %v1762 = vpop.f32.mrf.mxu0
        %1763 = vmatprep.mubr.bf16.mxu0 %v652
        %1764 = vmatmul.mubr.bf16.gmra.mxu0 %v587
        %v1765 = vpop.f32.mrf.mxu0
        %v1766 = vadd.f32 %v1605, %v1765
        %v1767 = vpop.f32.mrf.mxu0
        %v1768 = vpop.f32.mrf.mxu0
        %v1769 = vadd.f32 %v1608, %v1768
        %v1770 = vpop.f32.mrf.mxu0
        %1771 = vmatprep.mubr.bf16.mxu0 %v693
        %1772 = vmatmul.mubr.bf16.gmra.mxu0 %v689
        %v1773 = vpop.f32.mrf.mxu0
        %v1774 = vadd.f32 %v1613, %v1773
        %v1775 = vpop.f32.mrf.mxu0
        %v1776 = vpop.f32.mrf.mxu0
        %v1777 = vadd.f32 %v1616, %v1776
        %v1778 = vpop.f32.mrf.mxu0
        %1779 = vdwg.mxu0
        %1780 = vmatprep.subr.bf16.mxu0 0
        %1781 = vmatpush1.bf16.msra.mxu0 %v1208
        %1782 = vmatprep.subr.bf16.mxu0 0
        %1783 = vmatpush1.bf16.msra.mxu0 %v1207
        %1784 = vmatprep.subr.bf16.mxu0 0
        %1785 = vmatpush1.bf16.msra.mxu0 %v1206
        %1786 = vmatprep.subr.bf16.mxu0 0
        %1787 = vmatpush1.bf16.msra.mxu0 %v1205
        %1788 = vmatprep.subr.bf16.mxu0 0
        %1789 = vmatpush1.bf16.msra.mxu0 %v1204
        %1790 = vmatprep.subr.bf16.mxu0 0
        %1791 = vmatpush1.bf16.msra.mxu0 %v1203
        %1792 = vmatprep.subr.bf16.mxu0 0
        %1793 = vmatpush1.bf16.msra.mxu0 %v1202
        %1794 = vmatprep.subr.bf16.mxu0 0
        %1795 = vmatpush1.bf16.msra.mxu0 %v1201
        %1796 = vmatprep.subr.bf16.mxu0 0
        %1797 = vmatpush2.bf16.msra.mxu0 %v1216
        %1798 = vmatprep.subr.bf16.mxu0 0
        %1799 = vmatpush2.bf16.msra.mxu0 %v1215
        %1800 = vmatprep.subr.bf16.mxu0 0
        %1801 = vmatpush2.bf16.msra.mxu0 %v1214
        %1802 = vmatprep.subr.bf16.mxu0 0
        %1803 = vmatpush2.bf16.msra.mxu0 %v1213
        %1804 = vmatprep.subr.bf16.mxu0 0
        %1805 = vmatpush2.bf16.msra.mxu0 %v1212
        %1806 = vmatprep.subr.bf16.mxu0 0
        %1807 = vmatpush2.bf16.msra.mxu0 %v1211
        %1808 = vmatprep.subr.bf16.mxu0 0
        %1809 = vmatpush2.bf16.msra.mxu0 %v1210
        %1810 = vmatprep.subr.bf16.mxu0 0
        %1811 = vmatpush2.bf16.msra.mxu0 %v1209
        %1812 = vmatprep.mubr.bf16.mxu0 %v431
        %1813 = vmatmul.mubr.bf16.gmra.mxu0 %v317
        %v1814 = vpop.f32.mrf.mxu0
        %v1815 = vadd.f32 %v1654, %v1814
        %v1816 = vpop.f32.mrf.mxu0
        %v1817 = vpop.f32.mrf.mxu0
        %v1818 = vadd.f32 %v1657, %v1817
        %v1819 = vpop.f32.mrf.mxu0
        %1820 = vmatprep.mubr.bf16.mxu0 %v443
        %1821 = vmatmul.mubr.bf16.gmra.mxu0 %v318
        %v1822 = vpop.f32.mrf.mxu0
        %v1823 = vadd.f32 %v1662, %v1822
        %v1824 = vpop.f32.mrf.mxu0
        %v1825 = vpop.f32.mrf.mxu0
        %v1826 = vadd.f32 %v1665, %v1825
        %v1827 = vpop.f32.mrf.mxu0
        %1828 = vmatprep.mubr.bf16.mxu0 %v455
        %1829 = vmatmul.mubr.bf16.gmra.mxu0 %v319
        %v1830 = vpop.f32.mrf.mxu0
        %v1831 = vadd.f32 %v1670, %v1830
        %v1832 = vpop.f32.mrf.mxu0
        %v1833 = vpop.f32.mrf.mxu0
        %v1834 = vadd.f32 %v1673, %v1833
        %v1835 = vpop.f32.mrf.mxu0
        %1836 = vmatprep.mubr.bf16.mxu0 %v467
        %1837 = vmatmul.mubr.bf16.gmra.mxu0 %v320
        %v1838 = vpop.f32.mrf.mxu0
        %v1839 = vadd.f32 %v1678, %v1838
        %v1840 = vpop.f32.mrf.mxu0
        %v1841 = vpop.f32.mrf.mxu0
        %v1842 = vadd.f32 %v1681, %v1841
        %v1843 = vpop.f32.mrf.mxu0
        %1844 = vmatprep.mubr.bf16.mxu0 %v479
        %1845 = vmatmul.mubr.bf16.gmra.mxu0 %v321
        %v1846 = vpop.f32.mrf.mxu0
        %v1847 = vadd.f32 %v1686, %v1846
        %v1848 = vpop.f32.mrf.mxu0
        %v1849 = vpop.f32.mrf.mxu0
        %v1850 = vadd.f32 %v1689, %v1849
        %v1851 = vpop.f32.mrf.mxu0
        %1852 = vmatprep.mubr.bf16.mxu0 %v491
        %1853 = vmatmul.mubr.bf16.gmra.mxu0 %v322
        %v1854 = vpop.f32.mrf.mxu0
        %v1855 = vadd.f32 %v1694, %v1854
        %v1856 = vpop.f32.mrf.mxu0
        %v1857 = vpop.f32.mrf.mxu0
        %v1858 = vadd.f32 %v1697, %v1857
        %v1859 = vpop.f32.mrf.mxu0
        %1860 = vmatprep.mubr.bf16.mxu0 %v503
        %1861 = vmatmul.mubr.bf16.gmra.mxu0 %v323
        %v1862 = vpop.f32.mrf.mxu0
        %v1863 = vadd.f32 %v1702, %v1862
        %v1864 = vpop.f32.mrf.mxu0
        %v1865 = vpop.f32.mrf.mxu0
        %v1866 = vadd.f32 %v1705, %v1865
        %v1867 = vpop.f32.mrf.mxu0
        %1868 = vmatprep.mubr.bf16.mxu0 %v515
        %1869 = vmatmul.mubr.bf16.gmra.mxu0 %v324
        %v1870 = vpop.f32.mrf.mxu0
        %v1871 = vadd.f32 %v1710, %v1870
        %v1872 = vpop.f32.mrf.mxu0
        %v1873 = vpop.f32.mrf.mxu0
        %v1874 = vadd.f32 %v1713, %v1873
        %v1875 = vpop.f32.mrf.mxu0
        %1876 = vmatprep.mubr.bf16.mxu0 %v527
        %1877 = vmatmul.mubr.bf16.gmra.mxu0 %v325
        %v1878 = vpop.f32.mrf.mxu0
        %v1879 = vadd.f32 %v1718, %v1878
        %v1880 = vpop.f32.mrf.mxu0
        %v1881 = vpop.f32.mrf.mxu0
        %v1882 = vadd.f32 %v1721, %v1881
        %v1883 = vpop.f32.mrf.mxu0
        %1884 = vmatprep.mubr.bf16.mxu0 %v539
        %1885 = vmatmul.mubr.bf16.gmra.mxu0 %v326
        %v1886 = vpop.f32.mrf.mxu0
        %v1887 = vadd.f32 %v1726, %v1886
        %v1888 = vpop.f32.mrf.mxu0
        %v1889 = vpop.f32.mrf.mxu0
        %v1890 = vadd.f32 %v1729, %v1889
        %v1891 = vpop.f32.mrf.mxu0
        %1892 = vmatprep.mubr.bf16.mxu0 %v551
        %1893 = vmatmul.mubr.bf16.gmra.mxu0 %v327
        %v1894 = vpop.f32.mrf.mxu0
        %v1895 = vadd.f32 %v1734, %v1894
        %v1896 = vpop.f32.mrf.mxu0
        %v1897 = vpop.f32.mrf.mxu0
        %v1898 = vadd.f32 %v1737, %v1897
        %v1899 = vpop.f32.mrf.mxu0
        %1900 = vmatprep.mubr.bf16.mxu0 %v563
        %1901 = vmatmul.mubr.bf16.gmra.mxu0 %v328
        %v1902 = vpop.f32.mrf.mxu0
        %v1903 = vadd.f32 %v1742, %v1902
        %v1904 = vpop.f32.mrf.mxu0
        %v1905 = vpop.f32.mrf.mxu0
        %v1906 = vadd.f32 %v1745, %v1905
        %v1907 = vpop.f32.mrf.mxu0
        %1908 = vmatprep.mubr.bf16.mxu0 %v575
        %1909 = vmatmul.mubr.bf16.gmra.mxu0 %v329
        %v1910 = vpop.f32.mrf.mxu0
        %v1911 = vadd.f32 %v1750, %v1910
        %v1912 = vpop.f32.mrf.mxu0
        %v1913 = vpop.f32.mrf.mxu0
        %v1914 = vadd.f32 %v1753, %v1913
        %v1915 = vpop.f32.mrf.mxu0
        %1916 = vmatprep.mubr.bf16.mxu0 %v587
        %1917 = vmatmul.mubr.bf16.gmra.mxu0 %v330
        %v1918 = vpop.f32.mrf.mxu0
        %v1919 = vadd.f32 %v1758, %v1918
        %v1920 = vpop.f32.mrf.mxu0
        %v1921 = vpop.f32.mrf.mxu0
        %v1922 = vadd.f32 %v1761, %v1921
        %v1923 = vpop.f32.mrf.mxu0
        %1924 = vmatprep.mubr.bf16.mxu0 %v689
        %1925 = vmatmul.mubr.bf16.gmra.mxu0 %v673
        %v1926 = vpop.f32.mrf.mxu0
        %v1927 = vadd.f32 %v1766, %v1926
        %v1928 = vpop.f32.mrf.mxu0
        %v1929 = vpop.f32.mrf.mxu0
        %v1930 = vadd.f32 %v1769, %v1929
        %v1931 = vpop.f32.mrf.mxu0
        %1932 = vmatprep.mubr.bf16.mxu0 %v715
        %1933 = vmatmul.mubr.bf16.gmra.mxu0 %v699
        %v1934 = vpop.f32.mrf.mxu0
        %v1935 = vadd.f32 %v1774, %v1934
        %v1936 = vpop.f32.mrf.mxu0
        %v1937 = vpop.f32.mrf.mxu0
        %v1938 = vadd.f32 %v1777, %v1937
        %v1939 = vpop.f32.mrf.mxu0
        %1940 = vdwg.mxu0
        %1941 = vmatprep.subr.bf16.mxu0 0
        %1942 = vmatpush1.bf16.msra.mxu0 %v1224
        %1943 = vmatprep.subr.bf16.mxu0 0
        %1944 = vmatpush1.bf16.msra.mxu0 %v1223
        %1945 = vmatprep.subr.bf16.mxu0 0
        %1946 = vmatpush1.bf16.msra.mxu0 %v1222
        %1947 = vmatprep.subr.bf16.mxu0 0
        %1948 = vmatpush1.bf16.msra.mxu0 %v1221
        %1949 = vmatprep.subr.bf16.mxu0 0
        %1950 = vmatpush1.bf16.msra.mxu0 %v1220
        %1951 = vmatprep.subr.bf16.mxu0 0
        %1952 = vmatpush1.bf16.msra.mxu0 %v1219
        %1953 = vmatprep.subr.bf16.mxu0 0
        %1954 = vmatpush1.bf16.msra.mxu0 %v1218
        %1955 = vmatprep.subr.bf16.mxu0 0
        %1956 = vmatpush1.bf16.msra.mxu0 %v1217
        %1957 = vmatprep.subr.bf16.mxu0 0
        %1958 = vmatpush2.bf16.msra.mxu0 0
        %1959 = vmatprep.subr.bf16.mxu0 0
        %1960 = vmatpush2.bf16.msra.mxu0 0
        %1961 = vmatprep.subr.bf16.mxu0 0
        %1962 = vmatpush2.bf16.msra.mxu0 0
        %1963 = vmatprep.subr.bf16.mxu0 0
        %1964 = vmatpush2.bf16.msra.mxu0 0
        %1965 = vmatprep.subr.bf16.mxu0 0
        %1966 = vmatpush2.bf16.msra.mxu0 0
        %1967 = vmatprep.subr.bf16.mxu0 0
        %1968 = vmatpush2.bf16.msra.mxu0 0
        %1969 = vmatprep.subr.bf16.mxu0 0
        %1970 = vmatpush2.bf16.msra.mxu0 0
        %1971 = vmatprep.subr.bf16.mxu0 0
        %1972 = vmatpush2.bf16.msra.mxu0 0
        %1973 = vmatprep.mubr.bf16.mxu0 0
        %1974 = vmatmul.mubr.bf16.gmra.mxu0 %v613
        %v1975 = vpop.f32.mrf.mxu0
        %v1976 = vadd.f32 %v1815, %v1975
        %v1977 = vpop.f32.mrf.mxu0
        %v1978 = vpop.f32.mrf.mxu0
        %v1979 = vadd.f32 %v1818, %v1978
        %v1980 = vpop.f32.mrf.mxu0
        %1981 = vmatprep.mubr.bf16.mxu0 0
        %1982 = vmatmul.mubr.bf16.gmra.mxu0 %v616
        %v1983 = vpop.f32.mrf.mxu0
        %v1984 = vadd.f32 %v1823, %v1983
        %v1985 = vpop.f32.mrf.mxu0
        %v1986 = vpop.f32.mrf.mxu0
        %v1987 = vadd.f32 %v1826, %v1986
        %v1988 = vpop.f32.mrf.mxu0
        %1989 = vmatprep.mubr.bf16.mxu0 0
        %1990 = vmatmul.mubr.bf16.gmra.mxu0 %v619
        %v1991 = vpop.f32.mrf.mxu0
        %v1992 = vadd.f32 %v1831, %v1991
        %v1993 = vpop.f32.mrf.mxu0
        %v1994 = vpop.f32.mrf.mxu0
        %v1995 = vadd.f32 %v1834, %v1994
        %v1996 = vpop.f32.mrf.mxu0
        %1997 = vmatprep.mubr.bf16.mxu0 0
        %1998 = vmatmul.mubr.bf16.gmra.mxu0 %v622
        %v1999 = vpop.f32.mrf.mxu0
        %v2000 = vadd.f32 %v1839, %v1999
        %v2001 = vpop.f32.mrf.mxu0
        %v2002 = vpop.f32.mrf.mxu0
        %v2003 = vadd.f32 %v1842, %v2002
        %v2004 = vpop.f32.mrf.mxu0
        %2005 = vmatprep.mubr.bf16.mxu0 0
        %2006 = vmatmul.mubr.bf16.gmra.mxu0 %v625
        %v2007 = vpop.f32.mrf.mxu0
        %v2008 = vadd.f32 %v1847, %v2007
        %v2009 = vpop.f32.mrf.mxu0
        %v2010 = vpop.f32.mrf.mxu0
        %v2011 = vadd.f32 %v1850, %v2010
        %v2012 = vpop.f32.mrf.mxu0
        %2013 = vmatprep.mubr.bf16.mxu0 0
        %2014 = vmatmul.mubr.bf16.gmra.mxu0 %v628
        %v2015 = vpop.f32.mrf.mxu0
        %v2016 = vadd.f32 %v1855, %v2015
        %v2017 = vpop.f32.mrf.mxu0
        %v2018 = vpop.f32.mrf.mxu0
        %v2019 = vadd.f32 %v1858, %v2018
        %v2020 = vpop.f32.mrf.mxu0
        %2021 = vmatprep.mubr.bf16.mxu0 0
        %2022 = vmatmul.mubr.bf16.gmra.mxu0 %v631
        %v2023 = vpop.f32.mrf.mxu0
        %v2024 = vadd.f32 %v1863, %v2023
        %v2025 = vpop.f32.mrf.mxu0
        %v2026 = vpop.f32.mrf.mxu0
        %v2027 = vadd.f32 %v1866, %v2026
        %v2028 = vpop.f32.mrf.mxu0
        %2029 = vmatprep.mubr.bf16.mxu0 0
        %2030 = vmatmul.mubr.bf16.gmra.mxu0 %v634
        %v2031 = vpop.f32.mrf.mxu0
        %v2032 = vadd.f32 %v1871, %v2031
        %v2033 = vpop.f32.mrf.mxu0
        %v2034 = vpop.f32.mrf.mxu0
        %v2035 = vadd.f32 %v1874, %v2034
        %v2036 = vpop.f32.mrf.mxu0
        %2037 = vmatprep.mubr.bf16.mxu0 0
        %2038 = vmatmul.mubr.bf16.gmra.mxu0 %v637
        %v2039 = vpop.f32.mrf.mxu0
        %v2040 = vadd.f32 %v1879, %v2039
        %v2041 = vpop.f32.mrf.mxu0
        %v2042 = vpop.f32.mrf.mxu0
        %v2043 = vadd.f32 %v1882, %v2042
        %v2044 = vpop.f32.mrf.mxu0
        %2045 = vmatprep.mubr.bf16.mxu0 0
        %2046 = vmatmul.mubr.bf16.gmra.mxu0 %v640
        %v2047 = vpop.f32.mrf.mxu0
        %v2048 = vadd.f32 %v1887, %v2047
        %v2049 = vpop.f32.mrf.mxu0
        %v2050 = vpop.f32.mrf.mxu0
        %v2051 = vadd.f32 %v1890, %v2050
        %v2052 = vpop.f32.mrf.mxu0
        %2053 = vmatprep.mubr.bf16.mxu0 0
        %2054 = vmatmul.mubr.bf16.gmra.mxu0 %v643
        %v2055 = vpop.f32.mrf.mxu0
        %v2056 = vadd.f32 %v1895, %v2055
        %v2057 = vpop.f32.mrf.mxu0
        %v2058 = vpop.f32.mrf.mxu0
        %v2059 = vadd.f32 %v1898, %v2058
        %v2060 = vpop.f32.mrf.mxu0
        %2061 = vmatprep.mubr.bf16.mxu0 0
        %2062 = vmatmul.mubr.bf16.gmra.mxu0 %v646
        %v2063 = vpop.f32.mrf.mxu0
        %v2064 = vadd.f32 %v1903, %v2063
        %v2065 = vpop.f32.mrf.mxu0
        %v2066 = vpop.f32.mrf.mxu0
        %v2067 = vadd.f32 %v1906, %v2066
        %v2068 = vpop.f32.mrf.mxu0
        %2069 = vmatprep.mubr.bf16.mxu0 0
        %2070 = vmatmul.mubr.bf16.gmra.mxu0 %v649
        %v2071 = vpop.f32.mrf.mxu0
        %v2072 = vadd.f32 %v1911, %v2071
        %v2073 = vpop.f32.mrf.mxu0
        %v2074 = vpop.f32.mrf.mxu0
        %v2075 = vadd.f32 %v1914, %v2074
        %v2076 = vpop.f32.mrf.mxu0
        %2077 = vmatprep.mubr.bf16.mxu0 0
        %2078 = vmatmul.mubr.bf16.gmra.mxu0 %v652
        %v2079 = vpop.f32.mrf.mxu0
        %v2080 = vadd.f32 %v1919, %v2079
        %v2081 = vpop.f32.mrf.mxu0
        %v2082 = vpop.f32.mrf.mxu0
        %v2083 = vadd.f32 %v1922, %v2082
        %v2084 = vpop.f32.mrf.mxu0
        %2085 = vmatprep.mubr.bf16.mxu0 0
        %2086 = vmatmul.mubr.bf16.gmra.mxu0 %v693
        %v2087 = vpop.f32.mrf.mxu0
        %v2088 = vadd.f32 %v1927, %v2087
        %v2089 = vpop.f32.mrf.mxu0
        %v2090 = vpop.f32.mrf.mxu0
        %v2091 = vadd.f32 %v1930, %v2090
        %v2092 = vpop.f32.mrf.mxu0
        %2093 = vmatprep.mubr.bf16.mxu0 0
        %2094 = vmatmul.mubr.bf16.gmra.mxu0 %v719
        %v2095 = vpop.f32.mrf.mxu0
        %v2096 = vadd.f32 %v1935, %v2095
        %v2097 = vpop.f32.mrf.mxu0
        %v2098 = vpop.f32.mrf.mxu0
        %v2099 = vadd.f32 %v1938, %v2098
        %v2100 = vpop.f32.mrf.mxu0
        %2101 = vdwg.mxu0
        %v2102 = vld [vmem:[%s2] sm:$0x1]
        %v2104 = vlaneseq
        %v2105 = vshrl.u32 %v2104, 7
        %v2106 = vsub.s32 0, %v2105
        %v2107 = vrot.slane %v2102, %v2106
        %v2109 = vmul.f32 %v1976, %v2107
        %v2110 = vmul.f32 %v1979, %v2107
        %v2111 = vmul.f32 %v1984, %v2107
        %v2112 = vmul.f32 %v1987, %v2107
        %v2113 = vmul.f32 %v1992, %v2107
        %v2114 = vmul.f32 %v1995, %v2107
        %v2115 = vmul.f32 %v2000, %v2107
        %v2116 = vmul.f32 %v2003, %v2107
        %v2117 = vmul.f32 %v2008, %v2107
        %v2118 = vmul.f32 %v2011, %v2107
        %v2119 = vmul.f32 %v2016, %v2107
        %v2120 = vmul.f32 %v2019, %v2107
        %v2121 = vmul.f32 %v2024, %v2107
        %v2122 = vmul.f32 %v2027, %v2107
        %v2123 = vmul.f32 %v2032, %v2107
        %v2124 = vmul.f32 %v2035, %v2107
        %v2125 = vmul.f32 %v2040, %v2107
        %v2126 = vmul.f32 %v2043, %v2107
        %v2127 = vmul.f32 %v2048, %v2107
        %v2128 = vmul.f32 %v2051, %v2107
        %v2129 = vmul.f32 %v2056, %v2107
        %v2130 = vmul.f32 %v2059, %v2107
        %v2131 = vmul.f32 %v2064, %v2107
        %v2132 = vmul.f32 %v2067, %v2107
        %v2133 = vmul.f32 %v2072, %v2107
        %v2134 = vmul.f32 %v2075, %v2107
        %v2135 = vmul.f32 %v2080, %v2107
        %v2136 = vmul.f32 %v2083, %v2107
        %v2137 = vmul.f32 %v2088, %v2107
        %v2138 = vmul.f32 %v2091, %v2107
        %v2139 = vmul.f32 %v2096, %v2107
        %v2140 = vmul.f32 %v2099, %v2107
        %v2141 = vld [vmem:[%s3] sm:$0x1]
        %v2143 = vlaneseq
        %v2144 = vshrl.u32 %v2143, 7
        %v2145 = vsub.s32 0, %v2144
        %v2146 = vrot.slane %v2141, %v2145
        %v2148 = vadd.f32 %v2109, %v2146
        %v2149 = vadd.f32 %v2110, %v2146
        %v2150 = vadd.f32 %v2111, %v2146
        %v2151 = vadd.f32 %v2112, %v2146
        %v2152 = vadd.f32 %v2113, %v2146
        %v2153 = vadd.f32 %v2114, %v2146
        %v2154 = vadd.f32 %v2115, %v2146
        %v2155 = vadd.f32 %v2116, %v2146
        %v2156 = vadd.f32 %v2117, %v2146
        %v2157 = vadd.f32 %v2118, %v2146
        %v2158 = vadd.f32 %v2119, %v2146
        %v2159 = vadd.f32 %v2120, %v2146
        %v2160 = vadd.f32 %v2121, %v2146
        %v2161 = vadd.f32 %v2122, %v2146
        %v2162 = vadd.f32 %v2123, %v2146
        %v2163 = vadd.f32 %v2124, %v2146
        %v2164 = vadd.f32 %v2125, %v2146
        %v2165 = vadd.f32 %v2126, %v2146
        %v2166 = vadd.f32 %v2127, %v2146
        %v2167 = vadd.f32 %v2128, %v2146
        %v2168 = vadd.f32 %v2129, %v2146
        %v2169 = vadd.f32 %v2130, %v2146
        %v2170 = vadd.f32 %v2131, %v2146
        %v2171 = vadd.f32 %v2132, %v2146
        %v2172 = vadd.f32 %v2133, %v2146
        %v2173 = vadd.f32 %v2134, %v2146
        %v2174 = vadd.f32 %v2135, %v2146
        %v2175 = vadd.f32 %v2136, %v2146
        %v2176 = vadd.f32 %v2137, %v2146
        %v2177 = vadd.f32 %v2138, %v2146
        %v2178 = vadd.f32 %v2139, %v2146
        %v2179 = vadd.f32 %v2140, %v2146
        %v2180 = vmax.f32 %v2148, 0.0
        %v2181 = vmax.f32 %v2149, 0.0
        %v2182 = vmax.f32 %v2150, 0.0
        %v2183 = vmax.f32 %v2151, 0.0
        %v2184 = vmax.f32 %v2152, 0.0
        %v2185 = vmax.f32 %v2153, 0.0
        %v2186 = vmax.f32 %v2154, 0.0
        %v2187 = vmax.f32 %v2155, 0.0
        %v2188 = vmax.f32 %v2156, 0.0
        %v2189 = vmax.f32 %v2157, 0.0
        %v2190 = vmax.f32 %v2158, 0.0
        %v2191 = vmax.f32 %v2159, 0.0
        %v2192 = vmax.f32 %v2160, 0.0
        %v2193 = vmax.f32 %v2161, 0.0
        %v2194 = vmax.f32 %v2162, 0.0
        %v2195 = vmax.f32 %v2163, 0.0
        %v2196 = vmax.f32 %v2164, 0.0
        %v2197 = vmax.f32 %v2165, 0.0
        %v2198 = vmax.f32 %v2166, 0.0
        %v2199 = vmax.f32 %v2167, 0.0
        %v2200 = vmax.f32 %v2168, 0.0
        %v2201 = vmax.f32 %v2169, 0.0
        %v2202 = vmax.f32 %v2170, 0.0
        %v2203 = vmax.f32 %v2171, 0.0
        %v2204 = vmax.f32 %v2172, 0.0
        %v2205 = vmax.f32 %v2173, 0.0
        %v2206 = vmax.f32 %v2174, 0.0
        %v2207 = vmax.f32 %v2175, 0.0
        %v2208 = vmax.f32 %v2176, 0.0
        %v2209 = vmax.f32 %v2177, 0.0
        %v2210 = vmax.f32 %v2178, 0.0
        %v2211 = vmax.f32 %v2179, 0.0
        %2212 = vst [vmem:[%s190] sm:$0xff] %v2180
        %2213 = vst [vmem:[%s190 + $0x8] sm:$0xff] %v2181
        %2214 = vst [vmem:[%s190 + $0x10] sm:$0xff] %v2182
        %2215 = vst [vmem:[%s190 + $0x18] sm:$0xff] %v2183
        %2216 = vst [vmem:[%s190 + $0x20] sm:$0xff] %v2184
        %2217 = vst [vmem:[%s190 + $0x28] sm:$0xff] %v2185
        %2218 = vst [vmem:[%s190 + $0x30] sm:$0xff] %v2186
        %2219 = vst [vmem:[%s190 + $0x38] sm:$0xff] %v2187
        %2220 = vst [vmem:[%s190 + $0x40] sm:$0xff] %v2188
        %2221 = vst [vmem:[%s190 + $0x48] sm:$0xff] %v2189
        %2222 = vst [vmem:[%s190 + $0x50] sm:$0xff] %v2190
        %2223 = vst [vmem:[%s190 + $0x58] sm:$0xff] %v2191
        %2224 = vst [vmem:[%s190 + $0x60] sm:$0xff] %v2192
        %2225 = vst [vmem:[%s190 + $0x68] sm:$0xff] %v2193
        %2226 = vst [vmem:[%s190 + $0x70] sm:$0xff] %v2194
        %2227 = vst [vmem:[%s190 + $0x78] sm:$0xff] %v2195
        %2228 = vst [vmem:[%s190 + $0x80] sm:$0xff] %v2196
        %2229 = vst [vmem:[%s190 + $0x88] sm:$0xff] %v2197
        %2230 = vst [vmem:[%s190 + $0x90] sm:$0xff] %v2198
        %2231 = vst [vmem:[%s190 + $0x98] sm:$0xff] %v2199
        %2232 = vst [vmem:[%s190 + $0xa0] sm:$0xff] %v2200
        %2233 = vst [vmem:[%s190 + $0xa8] sm:$0xff] %v2201
        %2234 = vst [vmem:[%s190 + $0xb0] sm:$0xff] %v2202
        %2235 = vst [vmem:[%s190 + $0xb8] sm:$0xff] %v2203
        %2236 = vst [vmem:[%s190 + $0xc0] sm:$0xff] %v2204
        %2237 = vst [vmem:[%s190 + $0xc8] sm:$0xff] %v2205
        %2238 = vst [vmem:[%s190 + $0xd0] sm:$0xff] %v2206
        %2239 = vst [vmem:[%s190 + $0xd8] sm:$0xff] %v2207
        %2240 = vst [vmem:[%s190 + $0xe0] sm:$0xff] %v2208
        %2241 = vst [vmem:[%s190 + $0xe8] sm:$0xff] %v2209
        %2242 = vst [vmem:[%s190 + $0xf0] sm:$0xff] %v2210
        %2243 = vst [vmem:[%s190 + $0xf8] sm:$0xff] %v2211
        %s2244 = sand.u32 %s115, 1
        %s2245 = scalar_lea.sflag [#allocation3], %s2244
        %s2246 = sand.u32 %s115, 1
        %s2247 = smul.addr %s2246, 256
        %s2248 = scalar_lea.vmem [#allocation2], %s2247
        // Predicated region
        $region37: #{tpu_custom_call.1} parent=35 // pred_check
          %p2249 = pneg %p125
        $region38: #{tpu_custom_call.1} parent=35 // pred_check_branch
          %2251 = sbr.rel (%p2249) target = $region40
        $region39: #{tpu_custom_call.1} parent=35 // pred_region
          %s2253 = ssub.s32 4096, 4096
          %2254 = vsyncadd %s2245, %s2253
          %s2255 = smul.addr %s18, 32
          %s2256 = smul.addr %s2255, 128
          %s2257 = scalar_lea.hbm %s4, %s2256
          %s2258 = sshll.u32 %s2248, 4
          %s2259 = int_to_ptr.vmem [resolvable:$true] %s2258
          %2264 = dma.vmem_to_hbm [thread:$0]  %s2259, 4096, %s2257, %s2245, 128, 128, 8
        $region40: #{tpu_custom_call.1} parent=35 // pred_fallthru
          _
      $region36: #{tpu_custom_call.1} parent=5 // pred_fallthru
        _
      %p2265 = scmp.le.s32.totalorder 2, %s13
      // Predicated region
      $region41: #{tpu_custom_call.1} parent=5 // pred_check
        %p2266 = pneg %p2265
      $region42: #{tpu_custom_call.1} parent=5 // pred_check_branch
        %2268 = sbr.rel (%p2266) target = $region44
      $region43: #{tpu_custom_call.1} parent=5 // pred_region
        %s2269 = ssub.s32 %s13, 2
        // Predicated region
        $region45: #{tpu_custom_call.1} parent=43 // pred_check
          %p2270 = pneg %p131
        $region46: #{tpu_custom_call.1} parent=43 // pred_check_branch
          %2272 = sbr.rel (%p2270) target = $region48
        $region47: #{tpu_custom_call.1} parent=43 // pred_region
          %s2273 = sand.u32 %s116, 1
          %s2274 = scalar_lea.sflag [#allocation3], %s2273
          %s2275 = sand.u32 %s116, 1
          %s2276 = smul.addr %s2275, 256
          %s2277 = scalar_lea.vmem [#allocation2], %s2276
          %2278 = dma.done %s2274, 4096
        $region48: #{tpu_custom_call.1} parent=43 // pred_fallthru
          _
      $region44: #{tpu_custom_call.1} parent=5 // pred_fallthru
        _
    $region6: #{tpu_custom_call.1} parent=1 // loop_footer
      %s17 = sadd.s32 1, %s13
    $region7: #{tpu_custom_call.1} parent=1 // loop_footer_branch
      %12 = sbr.rel target = $region3
    $region8: #{tpu_custom_call.1} parent=1 // loop_exit
      _
    %2279 = vsyncpa [#allocation3], 1
    %s2280 = scalar_lea.sflag [#allocation3], 1
    %2281 = vsyncpa %s2280, 1

</llo_original>
